<compile_context>
chip_gen: v5e
topology: v5e:2x2
jax: 0.10.0
libtpu: 0.0.40
codegen_flags: <defaults>
</compile_context>

<pallas_src>
import functools
import math

import jax
import jax.numpy as jnp
from jax.experimental import pallas as pl
from jax.experimental.pallas import tpu as pltpu


# ----------------------------------------------------------------------------
# In-kernel helpers
# ----------------------------------------------------------------------------
def _layernorm(x, gamma, beta, eps=1e-5):
    # PyTorch LayerNorm: biased variance, eps inside sqrt. f32 math.
    mu = jnp.mean(x, axis=-1, keepdims=True)
    var = jnp.mean((x - mu) ** 2, axis=-1, keepdims=True)
    return (x - mu) * jax.lax.rsqrt(var + eps) * gamma + beta


# ----------------------------------------------------------------------------
# Fused Pallas kernel: all encoder layers + final LN + Wout head.
# Grid = (n_layers,), activation resident in VMEM scratch across layers.
# ----------------------------------------------------------------------------
def fused_transformer_kernel(
        x_ref,
        wqkv_ref, bqkv_ref, wo_ref, bo_ref, ln1g_ref, ln1b_ref,
        w1_ref, b1_ref, w2_ref, b2_ref, ln2g_ref, ln2b_ref,
        flng_ref, flnb_ref, wout_ref, bout_ref,
        o_ref,
        act_ref, attn_ref,
        *, batch, seq_len, num_heads):
    l = pl.program_id(0)

    # Load the embedded input into the resident activation scratch once.
    @pl.when(l == 0)
    def _load_input():
        act_ref[...] = x_ref[...]

    x = act_ref[...]                                  # (B*S, D) f32
    B, S, H = batch, seq_len, num_heads
    D = x.shape[-1]
    Dh = D // H
    scale = 1.0 / math.sqrt(Dh)

    # --- QKV projection (bf16 MXU operands, f32 accumulate) ------------------
    qkv = jnp.dot(x.astype(jnp.bfloat16), wqkv_ref[0],
                  preferred_element_type=jnp.float32) + bqkv_ref[0]   # (B*S, 3D)

    # --- head-batched causal self-attention ----------------------------------
    def head_slice(col0, b, h):
        c = col0 + h * Dh
        return qkv[b * S:(b + 1) * S, c:c + Dh]

    q = jnp.stack([head_slice(0, b, h)
                   for b in range(B) for h in range(H)], axis=0) * scale
    k = jnp.stack([head_slice(D, b, h)
                   for b in range(B) for h in range(H)], axis=0)
    v = jnp.stack([head_slice(2 * D, b, h)
                   for b in range(B) for h in range(H)], axis=0)      # (B*H, S, Dh)

    # Causal mask generated in-kernel (no HBM traffic).
    row = jax.lax.broadcasted_iota(jnp.int32, (S, S), 0)
    col = jax.lax.broadcasted_iota(jnp.int32, (S, S), 1)
    mask = jnp.where(col <= row, 0.0, -1e9).astype(jnp.float32)

    s = jnp.einsum('nqd,nkd->nqk', q.astype(jnp.bfloat16),
                   k.astype(jnp.bfloat16),
                   preferred_element_type=jnp.float32) + mask[None]
    s = s - jnp.max(s, axis=-1, keepdims=True)
    p = jnp.exp(s)
    p = p * pl.reciprocal(jnp.sum(p, axis=-1, keepdims=True), approx=True)
    ah = jnp.einsum('nqk,nkd->nqd', p.astype(jnp.bfloat16),
                    v.astype(jnp.bfloat16),
                    preferred_element_type=jnp.float32)               # (B*H, S, Dh)

    # Scatter head outputs into a VMEM slab (no lane-axis concatenate).
    for b in range(B):
        for h in range(H):
            attn_ref[b * S:(b + 1) * S, h * Dh:(h + 1) * Dh] = ah[b * H + h]

    attn = jnp.dot(attn_ref[...].astype(jnp.bfloat16), wo_ref[0],
                   preferred_element_type=jnp.float32) + bo_ref[0]

    # residual + LayerNorm 1 (dropout = identity in eval mode)
    h1 = _layernorm(x + attn, ln1g_ref[0], ln1b_ref[0])

    # --- feed forward ---------------------------------------------------------
    f = jnp.dot(h1.astype(jnp.bfloat16), w1_ref[0],
                preferred_element_type=jnp.float32) + b1_ref[0]
    f = jnp.maximum(f, 0.0)                                           # ReLU
    f = jnp.dot(f.astype(jnp.bfloat16), w2_ref[0],
                preferred_element_type=jnp.float32) + b2_ref[0]

    # residual + LayerNorm 2; keep the activation resident for the next layer.
    y = _layernorm(h1 + f, ln2g_ref[0], ln2b_ref[0])
    act_ref[...] = y

    # --- final encoder LayerNorm + Wout projection (lane-dense padded vocab) --
    @pl.when(l == pl.num_programs(0) - 1)
    def _final_head():
        hfin = _layernorm(y, flng_ref[...], flnb_ref[...])
        o_ref[...] = jnp.dot(hfin.astype(jnp.bfloat16), wout_ref[...],
                             preferred_element_type=jnp.float32) + bout_ref[...]


# ----------------------------------------------------------------------------
# Wrapper calling pallas_call
# ----------------------------------------------------------------------------
def _stacked_spec(arr):
    zeros = (0,) * (arr.ndim - 1)
    return pl.BlockSpec((1,) + arr.shape[1:], lambda l, _z=zeros: (l,) + _z)


def _const_spec(arr):
    zeros = (0,) * arr.ndim
    return pl.BlockSpec(arr.shape, lambda l, _z=zeros: _z)


def music_transformer_forward(tokens, params, num_heads):
    B, S = tokens.shape
    D = params['embedding'].shape[1]
    V = params['vocab_size']
    st = params['stacked']
    L = st['wqkv'].shape[0]
    Vpad = params['w_out_pad'].shape[1]

    # glue: embedding gather + sinusoidal PE (dropout = identity in eval mode)
    x = params['embedding'][tokens] + params['pe'][None, :S, :]
    x = x.reshape(B * S, D).astype(jnp.float32)

    kernel = functools.partial(fused_transformer_kernel,
                               batch=B, seq_len=S, num_heads=num_heads)

    operands = (
        x,
        st['wqkv'], st['bqkv'], st['wo'], st['bo'], st['ln1_g'], st['ln1_b'],
        st['w1'], st['b1'], st['w2'], st['b2'], st['ln2_g'], st['ln2_b'],
        params['final_ln_g'], params['final_ln_b'],
        params['w_out_pad'], params['b_out_pad'],
    )
    in_specs = ([_const_spec(operands[0])]
                + [_stacked_spec(a) for a in operands[1:13]]
                + [_const_spec(a) for a in operands[13:]])

    logits_flat = pl.pallas_call(
        kernel,
        out_shape=jax.ShapeDtypeStruct((B * S, Vpad), jnp.float32),
        grid=(L,),
        in_specs=in_specs,
        out_specs=pl.BlockSpec((B * S, Vpad), lambda l: (0, 0)),
        scratch_shapes=[pltpu.VMEM((B * S, D), jnp.float32),   # resident activation
                        pltpu.VMEM((B * S, D), jnp.float32)],  # attention head slab
        compiler_params=pltpu.CompilerParams(
            dimension_semantics=("arbitrary",)),
    )(*operands)

    return logits_flat[:, :V].reshape(B, S, V)


# ----------------------------------------------------------------------------
# Parameters (weights stacked per layer; MXU weight matrices stored in bf16)
# ----------------------------------------------------------------------------
def sinusoidal_pe(max_seq, d_model):
    position = jnp.arange(max_seq, dtype=jnp.float32)[:, None]
    div_term = jnp.exp(jnp.arange(0, d_model, 2, dtype=jnp.float32)
                       * (-math.log(10000.0) / d_model))
    pe = jnp.zeros((max_seq, d_model), jnp.float32)
    pe = pe.at[:, 0::2].set(jnp.sin(position * div_term))
    pe = pe.at[:, 1::2].set(jnp.cos(position * div_term))
    return pe


def init_params(key, vocab, d_model, d_ff, n_layers, max_seq, num_heads):
    assert d_model % num_heads == 0, "d_model must be divisible by num_heads"

    def nrm(k, shape, scale=0.02):
        return scale * jax.random.normal(k, shape, jnp.float32)

    keys = jax.random.split(key, 4 * n_layers + 2)
    ki = iter(keys)

    vpad = ((vocab + 127) // 128) * 128

    per_layer = {name: [] for name in
                 ('wqkv', 'bqkv', 'wo', 'bo', 'ln1_g', 'ln1_b',
                  'w1', 'b1', 'w2', 'b2', 'ln2_g', 'ln2_b')}
    for _ in range(n_layers):
        per_layer['wqkv'].append(nrm(next(ki), (d_model, 3 * d_model)))
        per_layer['bqkv'].append(jnp.zeros((1, 3 * d_model), jnp.float32))
        per_layer['wo'].append(nrm(next(ki), (d_model, d_model)))
        per_layer['bo'].append(jnp.zeros((1, d_model), jnp.float32))
        per_layer['ln1_g'].append(jnp.ones((1, d_model), jnp.float32))
        per_layer['ln1_b'].append(jnp.zeros((1, d_model), jnp.float32))
        per_layer['w1'].append(nrm(next(ki), (d_model, d_ff)))
        per_layer['b1'].append(jnp.zeros((1, d_ff), jnp.float32))
        per_layer['w2'].append(nrm(next(ki), (d_ff, d_model)))
        per_layer['b2'].append(jnp.zeros((1, d_model), jnp.float32))
        per_layer['ln2_g'].append(jnp.ones((1, d_model), jnp.float32))
        per_layer['ln2_b'].append(jnp.zeros((1, d_model), jnp.float32))

    bf16_names = {'wqkv', 'wo', 'w1', 'w2'}
    stacked = {}
    for name, arrs in per_layer.items():
        a = jnp.stack(arrs, axis=0)
        stacked[name] = a.astype(jnp.bfloat16) if name in bf16_names else a

    w_out = nrm(next(ki), (d_model, vocab))
    w_out_pad = jnp.zeros((d_model, vpad), jnp.float32).at[:, :vocab].set(w_out)

    return {
        'vocab_size': vocab,
        'embedding': nrm(next(ki), (vocab, d_model)),
        'pe': sinusoidal_pe(max_seq, d_model),
        'stacked': stacked,
        'final_ln_g': jnp.ones((1, d_model), jnp.float32),
        'final_ln_b': jnp.zeros((1, d_model), jnp.float32),
        'w_out_pad': w_out_pad.astype(jnp.bfloat16),
        'b_out_pad': jnp.zeros((1, vpad), jnp.float32),
    }


# ----------------------------------------------------------------------------
# Pure-JAX reference (f32, highest precision) for correctness check
# ----------------------------------------------------------------------------
def reference_forward(tokens, params, num_heads):
    B, S = tokens.shape
    D = params['embedding'].shape[1]
    H = num_heads
    Dh = D // H
    st = params['stacked']
    L = st['wqkv'].shape[0]
    hp = jax.lax.Precision.HIGHEST

    x = params['embedding'][tokens] + params['pe'][None, :S, :]

    idx = jnp.arange(S)
    mask = jnp.where(idx[None, :] <= idx[:, None], 0.0, -1e9).astype(jnp.float32)

    def ln(v, g, b):
        mu = v.mean(-1, keepdims=True)
        var = ((v - mu) ** 2).mean(-1, keepdims=True)
        return (v - mu) * jax.lax.rsqrt(var + 1e-5) * g + b

    for l in range(L):
        wqkv = st['wqkv'][l].astype(jnp.float32)
        wo = st['wo'][l].astype(jnp.float32)
        w1 = st['w1'][l].astype(jnp.float32)
        w2 = st['w2'][l].astype(jnp.float32)

        qkv = jnp.einsum('bsd,de->bse', x, wqkv, precision=hp) + st['bqkv'][l]
        q, k, v = qkv[..., :D], qkv[..., D:2 * D], qkv[..., 2 * D:]
        q = q.reshape(B, S, H, Dh).transpose(0, 2, 1, 3) / math.sqrt(Dh)
        k = k.reshape(B, S, H, Dh).transpose(0, 2, 1, 3)
        v = v.reshape(B, S, H, Dh).transpose(0, 2, 1, 3)
        s = jnp.einsum('bhqd,bhkd->bhqk', q, k, precision=hp) + mask
        p = jax.nn.softmax(s, axis=-1)
        a = jnp.einsum('bhqk,bhkd->bhqd', p, v, precision=hp)
        a = a.transpose(0, 2, 1, 3).reshape(B, S, D)
        a = jnp.einsum('bsd,de->bse', a, wo, precision=hp) + st['bo'][l]
        h1 = ln(x + a, st['ln1_g'][l], st['ln1_b'][l])
        f = jnp.einsum('bsd,df->bsf', h1, w1, precision=hp) + st['b1'][l]
        f = jnp.maximum(f, 0.0)
        f = jnp.einsum('bsf,fd->bsd', f, w2, precision=hp) + st['b2'][l]
        x = ln(h1 + f, st['ln2_g'][l], st['ln2_b'][l])

    x = ln(x, params['final_ln_g'], params['final_ln_b'])
    logits = jnp.einsum('bsd,dv->bsv', x,
                        params['w_out_pad'].astype(jnp.float32),
                        precision=hp) + params['b_out_pad']
    return logits[..., :params['vocab_size']]


# ----------------------------------------------------------------------------
if __name__ == "__main__":
    VOCAB_SIZE = 40
    D_MODEL = 32
    N_HEADS = 4
    D_FF = 64
    N_LAYERS = 2
    MAX_SEQ = 64
    B, S = 2, 8

    params = init_params(jax.random.PRNGKey(0), VOCAB_SIZE, D_MODEL, D_FF,
                         N_LAYERS, MAX_SEQ, N_HEADS)
    tokens = jax.random.randint(jax.random.PRNGKey(1), (B, S), 0, VOCAB_SIZE,
                                dtype=jnp.int32)

    logits = music_transformer_forward(tokens, params, num_heads=N_HEADS)
    logits = jax.block_until_ready(logits)

    assert logits.shape == (B, S, VOCAB_SIZE), logits.shape
    assert bool(jnp.all(jnp.isfinite(logits)))

    # Loose tolerance: kernel uses bf16 MXU operands + approx reciprocal.
    ref = reference_forward(tokens, params, num_heads=N_HEADS)
    max_diff = float(jnp.max(jnp.abs(logits - ref)))
    assert bool(jnp.allclose(logits, ref, atol=5e-2, rtol=5e-2)), max_diff

    print("KERNEL_OK")
</pallas_src>

<mosaic_0001>
module attributes {stable_mosaic.version = 11 : i64} {
  func.func @fused_transformer_kernel(%arg0: i32, %arg1: memref<16x32xf32, #tpu.memory_space<vmem>>, %arg2: memref<1x32x96xbf16, #tpu.memory_space<vmem>>, %arg3: memref<1x1x96xf32, #tpu.memory_space<vmem>>, %arg4: memref<1x32x32xbf16, #tpu.memory_space<vmem>>, %arg5: memref<1x1x32xf32, #tpu.memory_space<vmem>>, %arg6: memref<1x1x32xf32, #tpu.memory_space<vmem>>, %arg7: memref<1x1x32xf32, #tpu.memory_space<vmem>>, %arg8: memref<1x32x64xbf16, #tpu.memory_space<vmem>>, %arg9: memref<1x1x64xf32, #tpu.memory_space<vmem>>, %arg10: memref<1x64x32xbf16, #tpu.memory_space<vmem>>, %arg11: memref<1x1x32xf32, #tpu.memory_space<vmem>>, %arg12: memref<1x1x32xf32, #tpu.memory_space<vmem>>, %arg13: memref<1x1x32xf32, #tpu.memory_space<vmem>>, %arg14: memref<1x32xf32, #tpu.memory_space<vmem>>, %arg15: memref<1x32xf32, #tpu.memory_space<vmem>>, %arg16: memref<32x128xbf16, #tpu.memory_space<vmem>>, %arg17: memref<1x128xf32, #tpu.memory_space<vmem>>, %arg18: memref<16x128xf32, #tpu.memory_space<vmem>>, %arg19: memref<16x32xf32, #tpu.memory_space<vmem>>, %arg20: memref<16x32xf32, #tpu.memory_space<vmem>>) attributes {dimension_semantics = [#tpu.dimension_semantics<arbitrary>], iteration_bounds = array<i64: 2>, scalar_prefetch = 0 : i64, scratch_operands = 2 : i64, tpu.core_type = #tpu.core_type<tc>, window_params = [{pipeline_mode = #tpu.pipeline_mode<synchronous>, transform_indices = @transform_0, window_bounds = array<i64: 16, 32>}, {transform_indices = @transform_1, window_bounds = array<i64: 1, 32, 96>}, {transform_indices = @transform_2, window_bounds = array<i64: 1, 1, 96>}, {transform_indices = @transform_3, window_bounds = array<i64: 1, 32, 32>}, {transform_indices = @transform_4, window_bounds = array<i64: 1, 1, 32>}, {transform_indices = @transform_5, window_bounds = array<i64: 1, 1, 32>}, {transform_indices = @transform_6, window_bounds = array<i64: 1, 1, 32>}, {transform_indices = @transform_7, window_bounds = array<i64: 1, 32, 64>}, {transform_indices = @transform_8, window_bounds = array<i64: 1, 1, 64>}, {transform_indices = @transform_9, window_bounds = array<i64: 1, 64, 32>}, {transform_indices = @transform_10, window_bounds = array<i64: 1, 1, 32>}, {transform_indices = @transform_11, window_bounds = array<i64: 1, 1, 32>}, {transform_indices = @transform_12, window_bounds = array<i64: 1, 1, 32>}, {pipeline_mode = #tpu.pipeline_mode<synchronous>, transform_indices = @transform_13, window_bounds = array<i64: 1, 32>}, {pipeline_mode = #tpu.pipeline_mode<synchronous>, transform_indices = @transform_14, window_bounds = array<i64: 1, 32>}, {pipeline_mode = #tpu.pipeline_mode<synchronous>, transform_indices = @transform_15, window_bounds = array<i64: 32, 128>}, {pipeline_mode = #tpu.pipeline_mode<synchronous>, transform_indices = @transform_16, window_bounds = array<i64: 1, 128>}, {pipeline_mode = #tpu.pipeline_mode<synchronous>, transform_indices = @transform_17, window_bounds = array<i64: 16, 128>}]} {
    %c0_i32 = arith.constant 0 : i32
    %0 = arith.cmpi eq, %arg0, %c0_i32 : i32
    %1 = arith.extui %0 : i1 to i32
    %c0_i32_0 = arith.constant 0 : i32
    %2 = arith.cmpi ne, %1, %c0_i32_0 : i32
    scf.if %2 {
      %c0_77 = arith.constant 0 : index
      %c0_78 = arith.constant 0 : index
      %199 = vector.load %arg1[%c0_77, %c0_78] : memref<16x32xf32, #tpu.memory_space<vmem>>, vector<16x32xf32>
      %c0_79 = arith.constant 0 : index
      %c0_80 = arith.constant 0 : index
      %200 = vector.load %arg19[%c0_79, %c0_80] : memref<16x32xf32, #tpu.memory_space<vmem>>, vector<16x32xf32>
      tpu.vector_store %arg19[%c0_79, %c0_80], %199 {strides = array<i32>} : memref<16x32xf32, #tpu.memory_space<vmem>>, vector<16x32xf32>,
    } else {
    }
    %c0 = arith.constant 0 : index
    %c0_1 = arith.constant 0 : index
    %3 = vector.load %arg19[%c0, %c0_1] : memref<16x32xf32, #tpu.memory_space<vmem>>, vector<16x32xf32>
    %4 = arith.truncf %3 : vector<16x32xf32> to vector<16x32xbf16>
    %c0_2 = arith.constant 0 : index
    %c0_3 = arith.constant 0 : index
    %c0_4 = arith.constant 0 : index
    %5 = vector.load %arg2[%c0_2, %c0_3, %c0_4] : memref<1x32x96xbf16, #tpu.memory_space<vmem>>, vector<1x32x96xbf16>
    %6 = vector.shape_cast %5 : vector<1x32x96xbf16> to vector<32x96xbf16>
    %cst = arith.constant dense<0.000000e+00> : vector<16x96xf32>
    %7 = tpu.matmul %4, %6, %cst {dimension_numbers = #tpu.dot_dimension_numbers<[1], [0], [0], [1], [0, 0, 1, 1], [], []>} : vector<16x32xbf16>, vector<32x96xbf16>, vector<16x96xf32> -> vector<16x96xf32>
    %c0_5 = arith.constant 0 : index
    %c0_6 = arith.constant 0 : index
    %c0_7 = arith.constant 0 : index
    %8 = vector.load %arg3[%c0_5, %c0_6, %c0_7] : memref<1x1x96xf32, #tpu.memory_space<vmem>>, vector<1x1x96xf32>
    %9 = vector.shape_cast %8 : vector<1x1x96xf32> to vector<1x96xf32>
    %10 = vector.broadcast %9 : vector<1x96xf32> to vector<16x96xf32>
    %11 = arith.addf %7, %10 : vector<16x96xf32>
    %12 = vector.extract_strided_slice %11 {offsets = [0, 0], sizes = [8, 8], strides = [1, 1]} : vector<16x96xf32> to vector<8x8xf32>
    %13 = vector.extract_strided_slice %11 {offsets = [0, 8], sizes = [8, 8], strides = [1, 1]} : vector<16x96xf32> to vector<8x8xf32>
    %14 = vector.extract_strided_slice %11 {offsets = [0, 16], sizes = [8, 8], strides = [1, 1]} : vector<16x96xf32> to vector<8x8xf32>
    %15 = vector.extract_strided_slice %11 {offsets = [0, 24], sizes = [8, 8], strides = [1, 1]} : vector<16x96xf32> to vector<8x8xf32>
    %16 = vector.extract_strided_slice %11 {offsets = [8, 0], sizes = [8, 8], strides = [1, 1]} : vector<16x96xf32> to vector<8x8xf32>
    %17 = vector.extract_strided_slice %11 {offsets = [8, 8], sizes = [8, 8], strides = [1, 1]} : vector<16x96xf32> to vector<8x8xf32>
    %18 = vector.extract_strided_slice %11 {offsets = [8, 16], sizes = [8, 8], strides = [1, 1]} : vector<16x96xf32> to vector<8x8xf32>
    %19 = vector.extract_strided_slice %11 {offsets = [8, 24], sizes = [8, 8], strides = [1, 1]} : vector<16x96xf32> to vector<8x8xf32>
    %20 = vector.shape_cast %12 : vector<8x8xf32> to vector<1x8x8xf32>
    %21 = vector.shape_cast %13 : vector<8x8xf32> to vector<1x8x8xf32>
    %22 = vector.shape_cast %14 : vector<8x8xf32> to vector<1x8x8xf32>
    %23 = vector.shape_cast %15 : vector<8x8xf32> to vector<1x8x8xf32>
    %24 = vector.shape_cast %16 : vector<8x8xf32> to vector<1x8x8xf32>
    %25 = vector.shape_cast %17 : vector<8x8xf32> to vector<1x8x8xf32>
    %26 = vector.shape_cast %18 : vector<8x8xf32> to vector<1x8x8xf32>
    %27 = vector.shape_cast %19 : vector<8x8xf32> to vector<1x8x8xf32>
    %28 = tpu.concatenate %20, %21, %22, %23, %24, %25, %26, %27 in 0 : vector<1x8x8xf32>, vector<1x8x8xf32>, vector<1x8x8xf32>, vector<1x8x8xf32>, vector<1x8x8xf32>, vector<1x8x8xf32>, vector<1x8x8xf32>, vector<1x8x8xf32> -> vector<8x8x8xf32>
    %cst_8 = arith.constant 0.353553385 : f32
    %29 = vector.broadcast %cst_8 : f32 to vector<8x8x8xf32>
    %30 = arith.mulf %28, %29 : vector<8x8x8xf32>
    %31 = vector.extract_strided_slice %11 {offsets = [0, 32], sizes = [8, 8], strides = [1, 1]} : vector<16x96xf32> to vector<8x8xf32>
    %32 = vector.extract_strided_slice %11 {offsets = [0, 40], sizes = [8, 8], strides = [1, 1]} : vector<16x96xf32> to vector<8x8xf32>
    %33 = vector.extract_strided_slice %11 {offsets = [0, 48], sizes = [8, 8], strides = [1, 1]} : vector<16x96xf32> to vector<8x8xf32>
    %34 = vector.extract_strided_slice %11 {offsets = [0, 56], sizes = [8, 8], strides = [1, 1]} : vector<16x96xf32> to vector<8x8xf32>
    %35 = vector.extract_strided_slice %11 {offsets = [8, 32], sizes = [8, 8], strides = [1, 1]} : vector<16x96xf32> to vector<8x8xf32>
    %36 = vector.extract_strided_slice %11 {offsets = [8, 40], sizes = [8, 8], strides = [1, 1]} : vector<16x96xf32> to vector<8x8xf32>
    %37 = vector.extract_strided_slice %11 {offsets = [8, 48], sizes = [8, 8], strides = [1, 1]} : vector<16x96xf32> to vector<8x8xf32>
    %38 = vector.extract_strided_slice %11 {offsets = [8, 56], sizes = [8, 8], strides = [1, 1]} : vector<16x96xf32> to vector<8x8xf32>
    %39 = vector.shape_cast %31 : vector<8x8xf32> to vector<1x8x8xf32>
    %40 = vector.shape_cast %32 : vector<8x8xf32> to vector<1x8x8xf32>
    %41 = vector.shape_cast %33 : vector<8x8xf32> to vector<1x8x8xf32>
    %42 = vector.shape_cast %34 : vector<8x8xf32> to vector<1x8x8xf32>
    %43 = vector.shape_cast %35 : vector<8x8xf32> to vector<1x8x8xf32>
    %44 = vector.shape_cast %36 : vector<8x8xf32> to vector<1x8x8xf32>
    %45 = vector.shape_cast %37 : vector<8x8xf32> to vector<1x8x8xf32>
    %46 = vector.shape_cast %38 : vector<8x8xf32> to vector<1x8x8xf32>
    %47 = tpu.concatenate %39, %40, %41, %42, %43, %44, %45, %46 in 0 : vector<1x8x8xf32>, vector<1x8x8xf32>, vector<1x8x8xf32>, vector<1x8x8xf32>, vector<1x8x8xf32>, vector<1x8x8xf32>, vector<1x8x8xf32>, vector<1x8x8xf32> -> vector<8x8x8xf32>
    %48 = vector.extract_strided_slice %11 {offsets = [0, 64], sizes = [8, 8], strides = [1, 1]} : vector<16x96xf32> to vector<8x8xf32>
    %49 = vector.extract_strided_slice %11 {offsets = [0, 72], sizes = [8, 8], strides = [1, 1]} : vector<16x96xf32> to vector<8x8xf32>
    %50 = vector.extract_strided_slice %11 {offsets = [0, 80], sizes = [8, 8], strides = [1, 1]} : vector<16x96xf32> to vector<8x8xf32>
    %51 = vector.extract_strided_slice %11 {offsets = [0, 88], sizes = [8, 8], strides = [1, 1]} : vector<16x96xf32> to vector<8x8xf32>
    %52 = vector.extract_strided_slice %11 {offsets = [8, 64], sizes = [8, 8], strides = [1, 1]} : vector<16x96xf32> to vector<8x8xf32>
    %53 = vector.extract_strided_slice %11 {offsets = [8, 72], sizes = [8, 8], strides = [1, 1]} : vector<16x96xf32> to vector<8x8xf32>
    %54 = vector.extract_strided_slice %11 {offsets = [8, 80], sizes = [8, 8], strides = [1, 1]} : vector<16x96xf32> to vector<8x8xf32>
    %55 = vector.extract_strided_slice %11 {offsets = [8, 88], sizes = [8, 8], strides = [1, 1]} : vector<16x96xf32> to vector<8x8xf32>
    %56 = vector.shape_cast %48 : vector<8x8xf32> to vector<1x8x8xf32>
    %57 = vector.shape_cast %49 : vector<8x8xf32> to vector<1x8x8xf32>
    %58 = vector.shape_cast %50 : vector<8x8xf32> to vector<1x8x8xf32>
    %59 = vector.shape_cast %51 : vector<8x8xf32> to vector<1x8x8xf32>
    %60 = vector.shape_cast %52 : vector<8x8xf32> to vector<1x8x8xf32>
    %61 = vector.shape_cast %53 : vector<8x8xf32> to vector<1x8x8xf32>
    %62 = vector.shape_cast %54 : vector<8x8xf32> to vector<1x8x8xf32>
    %63 = vector.shape_cast %55 : vector<8x8xf32> to vector<1x8x8xf32>
    %64 = tpu.concatenate %56, %57, %58, %59, %60, %61, %62, %63 in 0 : vector<1x8x8xf32>, vector<1x8x8xf32>, vector<1x8x8xf32>, vector<1x8x8xf32>, vector<1x8x8xf32>, vector<1x8x8xf32>, vector<1x8x8xf32>, vector<1x8x8xf32> -> vector<8x8x8xf32>
    %65 = tpu.iota {dimensions = array<i32: 0>} : vector<8x8xi32>
    %66 = tpu.iota {dimensions = array<i32: 1>} : vector<8x8xi32>
    %67 = arith.cmpi sle, %66, %65 : vector<8x8xi32>
    %cst_9 = arith.constant 0.000000e+00 : f32
    %cst_10 = arith.constant -1.000000e+09 : f32
    %68 = vector.broadcast %cst_9 : f32 to vector<8x8xf32>
    %69 = vector.broadcast %cst_10 : f32 to vector<8x8xf32>
    %70 = arith.select %67, %68, %69 : vector<8x8xi1>, vector<8x8xf32>
    %71 = arith.truncf %30 : vector<8x8x8xf32> to vector<8x8x8xbf16>
    %72 = arith.truncf %47 : vector<8x8x8xf32> to vector<8x8x8xbf16>
    "tpu.trace_start"() <{level = 10 : i32, message = "nqd,nkd->nqk"}> : () -> ()
    %cst_11 = arith.constant dense<0.000000e+00> : vector<8x8x8xf32>
    %73 = tpu.matmul %71, %72, %cst_11 {dimension_numbers = #tpu.dot_dimension_numbers<[2], [2], [1], [1], [0, 0, 0, 1, 1, 1], [0], [0]>} : vector<8x8x8xbf16>, vector<8x8x8xbf16>, vector<8x8x8xf32> -> vector<8x8x8xf32>
    "tpu.trace_stop"() : () -> ()
    %74 = vector.shape_cast %70 : vector<8x8xf32> to vector<1x8x8xf32>
    %75 = vector.broadcast %74 : vector<1x8x8xf32> to vector<8x8x8xf32>
    %76 = arith.addf %73, %75 : vector<8x8x8xf32>
    %cst_12 = arith.constant dense<0xFF800000> : vector<8x8xf32>
    %77 = vector.multi_reduction <maximumf>, %76, %cst_12 [2] : vector<8x8x8xf32> to vector<8x8xf32>
    %78 = vector.shape_cast %77 : vector<8x8xf32> to vector<8x8x1xf32>
    %79 = vector.broadcast %78 : vector<8x8x1xf32> to vector<8x8x8xf32>
    %80 = arith.subf %76, %79 : vector<8x8x8xf32>
    %81 = math.exp %80 : vector<8x8x8xf32>
    %cst_13 = arith.constant dense<0.000000e+00> : vector<8x8xf32>
    %82 = vector.multi_reduction <add>, %81, %cst_13 [2] : vector<8x8x8xf32> to vector<8x8xf32>
    %83 = vector.shape_cast %82 : vector<8x8xf32> to vector<8x8x1xf32>
    %84 = tpu.reciprocal %83 {approx = true} : vector<8x8x1xf32> -> vector<8x8x1xf32>
    %85 = vector.broadcast %84 : vector<8x8x1xf32> to vector<8x8x8xf32>
    %86 = arith.mulf %81, %85 : vector<8x8x8xf32>
    %87 = arith.truncf %86 : vector<8x8x8xf32> to vector<8x8x8xbf16>
    %88 = arith.truncf %64 : vector<8x8x8xf32> to vector<8x8x8xbf16>
    "tpu.trace_start"() <{level = 10 : i32, message = "nqk,nkd->nqd"}> : () -> ()
    %cst_14 = arith.constant dense<0.000000e+00> : vector<8x8x8xf32>
    %89 = tpu.matmul %87, %88, %cst_14 {dimension_numbers = #tpu.dot_dimension_numbers<[2], [1], [1], [2], [0, 0, 0, 1, 1, 2], [0], [0]>} : vector<8x8x8xbf16>, vector<8x8x8xbf16>, vector<8x8x8xf32> -> vector<8x8x8xf32>
    "tpu.trace_stop"() : () -> ()
    %90 = vector.extract_strided_slice %89 {offsets = [0, 0, 0], sizes = [1, 8, 8], strides = [1, 1, 1]} : vector<8x8x8xf32> to vector<1x8x8xf32>
    %91 = vector.shape_cast %90 : vector<1x8x8xf32> to vector<8x8xf32>
    %c0_15 = arith.constant 0 : index
    %c0_16 = arith.constant 0 : index
    %92 = vector.load %arg20[%c0_15, %c0_16] : memref<16x32xf32, #tpu.memory_space<vmem>>, vector<8x8xf32>
    tpu.vector_store %arg20[%c0_15, %c0_16], %91 {strides = array<i32>} : memref<16x32xf32, #tpu.memory_space<vmem>>, vector<8x8xf32>,
    %93 = vector.extract_strided_slice %89 {offsets = [1, 0, 0], sizes = [1, 8, 8], strides = [1, 1, 1]} : vector<8x8x8xf32> to vector<1x8x8xf32>
    %94 = vector.shape_cast %93 : vector<1x8x8xf32> to vector<8x8xf32>
    %c0_17 = arith.constant 0 : index
    %c8 = arith.constant 8 : index
    %95 = vector.load %arg20[%c0_17, %c8] : memref<16x32xf32, #tpu.memory_space<vmem>>, vector<8x8xf32>
    tpu.vector_store %arg20[%c0_17, %c8], %94 {strides = array<i32>} : memref<16x32xf32, #tpu.memory_space<vmem>>, vector<8x8xf32>,
    %96 = vector.extract_strided_slice %89 {offsets = [2, 0, 0], sizes = [1, 8, 8], strides = [1, 1, 1]} : vector<8x8x8xf32> to vector<1x8x8xf32>
    %97 = vector.shape_cast %96 : vector<1x8x8xf32> to vector<8x8xf32>
    %c0_18 = arith.constant 0 : index
    %c16 = arith.constant 16 : index
    %98 = vector.load %arg20[%c0_18, %c16] : memref<16x32xf32, #tpu.memory_space<vmem>>, vector<8x8xf32>
    tpu.vector_store %arg20[%c0_18, %c16], %97 {strides = array<i32>} : memref<16x32xf32, #tpu.memory_space<vmem>>, vector<8x8xf32>,
    %99 = vector.extract_strided_slice %89 {offsets = [3, 0, 0], sizes = [1, 8, 8], strides = [1, 1, 1]} : vector<8x8x8xf32> to vector<1x8x8xf32>
    %100 = vector.shape_cast %99 : vector<1x8x8xf32> to vector<8x8xf32>
    %c0_19 = arith.constant 0 : index
    %c24 = arith.constant 24 : index
    %101 = vector.load %arg20[%c0_19, %c24] : memref<16x32xf32, #tpu.memory_space<vmem>>, vector<8x8xf32>
    tpu.vector_store %arg20[%c0_19, %c24], %100 {strides = array<i32>} : memref<16x32xf32, #tpu.memory_space<vmem>>, vector<8x8xf32>,
    %102 = vector.extract_strided_slice %89 {offsets = [4, 0, 0], sizes = [1, 8, 8], strides = [1, 1, 1]} : vector<8x8x8xf32> to vector<1x8x8xf32>
    %103 = vector.shape_cast %102 : vector<1x8x8xf32> to vector<8x8xf32>
    %c8_20 = arith.constant 8 : index
    %c0_21 = arith.constant 0 : index
    %104 = vector.load %arg20[%c8_20, %c0_21] : memref<16x32xf32, #tpu.memory_space<vmem>>, vector<8x8xf32>
    tpu.vector_store %arg20[%c8_20, %c0_21], %103 {strides = array<i32>} : memref<16x32xf32, #tpu.memory_space<vmem>>, vector<8x8xf32>,
    %105 = vector.extract_strided_slice %89 {offsets = [5, 0, 0], sizes = [1, 8, 8], strides = [1, 1, 1]} : vector<8x8x8xf32> to vector<1x8x8xf32>
    %106 = vector.shape_cast %105 : vector<1x8x8xf32> to vector<8x8xf32>
    %c8_22 = arith.constant 8 : index
    %c8_23 = arith.constant 8 : index
    %107 = vector.load %arg20[%c8_22, %c8_23] : memref<16x32xf32, #tpu.memory_space<vmem>>, vector<8x8xf32>
    tpu.vector_store %arg20[%c8_22, %c8_23], %106 {strides = array<i32>} : memref<16x32xf32, #tpu.memory_space<vmem>>, vector<8x8xf32>,
    %108 = vector.extract_strided_slice %89 {offsets = [6, 0, 0], sizes = [1, 8, 8], strides = [1, 1, 1]} : vector<8x8x8xf32> to vector<1x8x8xf32>
    %109 = vector.shape_cast %108 : vector<1x8x8xf32> to vector<8x8xf32>
    %c8_24 = arith.constant 8 : index
    %c16_25 = arith.constant 16 : index
    %110 = vector.load %arg20[%c8_24, %c16_25] : memref<16x32xf32, #tpu.memory_space<vmem>>, vector<8x8xf32>
    tpu.vector_store %arg20[%c8_24, %c16_25], %109 {strides = array<i32>} : memref<16x32xf32, #tpu.memory_space<vmem>>, vector<8x8xf32>,
    %111 = vector.extract_strided_slice %89 {offsets = [7, 0, 0], sizes = [1, 8, 8], strides = [1, 1, 1]} : vector<8x8x8xf32> to vector<1x8x8xf32>
    %112 = vector.shape_cast %111 : vector<1x8x8xf32> to vector<8x8xf32>
    %c8_26 = arith.constant 8 : index
    %c24_27 = arith.constant 24 : index
    %113 = vector.load %arg20[%c8_26, %c24_27] : memref<16x32xf32, #tpu.memory_space<vmem>>, vector<8x8xf32>
    tpu.vector_store %arg20[%c8_26, %c24_27], %112 {strides = array<i32>} : memref<16x32xf32, #tpu.memory_space<vmem>>, vector<8x8xf32>,
    %c0_28 = arith.constant 0 : index
    %c0_29 = arith.constant 0 : index
    %114 = vector.load %arg20[%c0_28, %c0_29] : memref<16x32xf32, #tpu.memory_space<vmem>>, vector<16x32xf32>
    %115 = arith.truncf %114 : vector<16x32xf32> to vector<16x32xbf16>
    %c0_30 = arith.constant 0 : index
    %c0_31 = arith.constant 0 : index
    %c0_32 = arith.constant 0 : index
    %116 = vector.load %arg4[%c0_30, %c0_31, %c0_32] : memref<1x32x32xbf16, #tpu.memory_space<vmem>>, vector<1x32x32xbf16>
    %117 = vector.shape_cast %116 : vector<1x32x32xbf16> to vector<32x32xbf16>
    %cst_33 = arith.constant dense<0.000000e+00> : vector<16x32xf32>
    %118 = tpu.matmul %115, %117, %cst_33 {dimension_numbers = #tpu.dot_dimension_numbers<[1], [0], [0], [1], [0, 0, 1, 1], [], []>} : vector<16x32xbf16>, vector<32x32xbf16>, vector<16x32xf32> -> vector<16x32xf32>
    %c0_34 = arith.constant 0 : index
    %c0_35 = arith.constant 0 : index
    %c0_36 = arith.constant 0 : index
    %119 = vector.load %arg5[%c0_34, %c0_35, %c0_36] : memref<1x1x32xf32, #tpu.memory_space<vmem>>, vector<1x1x32xf32>
    %120 = vector.shape_cast %119 : vector<1x1x32xf32> to vector<1x32xf32>
    %121 = vector.broadcast %120 : vector<1x32xf32> to vector<16x32xf32>
    %122 = arith.addf %118, %121 : vector<16x32xf32>
    %123 = arith.addf %3, %122 : vector<16x32xf32>
    %c0_37 = arith.constant 0 : index
    %c0_38 = arith.constant 0 : index
    %c0_39 = arith.constant 0 : index
    %124 = vector.load %arg6[%c0_37, %c0_38, %c0_39] : memref<1x1x32xf32, #tpu.memory_space<vmem>>, vector<1x1x32xf32>
    %125 = vector.shape_cast %124 : vector<1x1x32xf32> to vector<1x32xf32>
    %c0_40 = arith.constant 0 : index
    %c0_41 = arith.constant 0 : index
    %c0_42 = arith.constant 0 : index
    %126 = vector.load %arg7[%c0_40, %c0_41, %c0_42] : memref<1x1x32xf32, #tpu.memory_space<vmem>>, vector<1x1x32xf32>
    %127 = vector.shape_cast %126 : vector<1x1x32xf32> to vector<1x32xf32>
    %cst_43 = arith.constant dense<0.000000e+00> : vector<16xf32>
    %128 = vector.multi_reduction <add>, %123, %cst_43 [1] : vector<16x32xf32> to vector<16xf32>
    %129 = vector.shape_cast %128 : vector<16xf32> to vector<16x1xf32>
    %cst_44 = arith.constant 3.200000e+01 : f32
    %130 = vector.broadcast %cst_44 : f32 to vector<16x1xf32>
    %131 = arith.divf %129, %130 : vector<16x1xf32>
    %132 = vector.broadcast %131 : vector<16x1xf32> to vector<16x32xf32>
    %133 = arith.subf %123, %132 : vector<16x32xf32>
    %134 = arith.mulf %133, %133 : vector<16x32xf32>
    %cst_45 = arith.constant dense<0.000000e+00> : vector<16xf32>
    %135 = vector.multi_reduction <add>, %134, %cst_45 [1] : vector<16x32xf32> to vector<16xf32>
    %136 = vector.shape_cast %135 : vector<16xf32> to vector<16x1xf32>
    %cst_46 = arith.constant 3.200000e+01 : f32
    %137 = vector.broadcast %cst_46 : f32 to vector<16x1xf32>
    %138 = arith.divf %136, %137 : vector<16x1xf32>
    %139 = vector.broadcast %131 : vector<16x1xf32> to vector<16x32xf32>
    %140 = arith.subf %123, %139 : vector<16x32xf32>
    %cst_47 = arith.constant 9.99999974E-6 : f32
    %141 = vector.broadcast %cst_47 : f32 to vector<16x1xf32>
    %142 = arith.addf %138, %141 : vector<16x1xf32>
    %143 = math.rsqrt %142 : vector<16x1xf32>
    %144 = vector.broadcast %143 : vector<16x1xf32> to vector<16x32xf32>
    %145 = arith.mulf %140, %144 : vector<16x32xf32>
    %146 = vector.broadcast %125 : vector<1x32xf32> to vector<16x32xf32>
    %147 = arith.mulf %145, %146 : vector<16x32xf32>
    %148 = vector.broadcast %127 : vector<1x32xf32> to vector<16x32xf32>
    %149 = arith.addf %147, %148 : vector<16x32xf32>
    %150 = arith.truncf %149 : vector<16x32xf32> to vector<16x32xbf16>
    %c0_48 = arith.constant 0 : index
    %c0_49 = arith.constant 0 : index
    %c0_50 = arith.constant 0 : index
    %151 = vector.load %arg8[%c0_48, %c0_49, %c0_50] : memref<1x32x64xbf16, #tpu.memory_space<vmem>>, vector<1x32x64xbf16>
    %152 = vector.shape_cast %151 : vector<1x32x64xbf16> to vector<32x64xbf16>
    %cst_51 = arith.constant dense<0.000000e+00> : vector<16x64xf32>
    %153 = tpu.matmul %150, %152, %cst_51 {dimension_numbers = #tpu.dot_dimension_numbers<[1], [0], [0], [1], [0, 0, 1, 1], [], []>} : vector<16x32xbf16>, vector<32x64xbf16>, vector<16x64xf32> -> vector<16x64xf32>
    %c0_52 = arith.constant 0 : index
    %c0_53 = arith.constant 0 : index
    %c0_54 = arith.constant 0 : index
    %154 = vector.load %arg9[%c0_52, %c0_53, %c0_54] : memref<1x1x64xf32, #tpu.memory_space<vmem>>, vector<1x1x64xf32>
    %155 = vector.shape_cast %154 : vector<1x1x64xf32> to vector<1x64xf32>
    %156 = vector.broadcast %155 : vector<1x64xf32> to vector<16x64xf32>
    %157 = arith.addf %153, %156 : vector<16x64xf32>
    %cst_55 = arith.constant 0.000000e+00 : f32
    %158 = vector.broadcast %cst_55 : f32 to vector<16x64xf32>
    %159 = arith.maximumf %157, %158 : vector<16x64xf32>
    %160 = arith.truncf %159 : vector<16x64xf32> to vector<16x64xbf16>
    %c0_56 = arith.constant 0 : index
    %c0_57 = arith.constant 0 : index
    %c0_58 = arith.constant 0 : index
    %161 = vector.load %arg10[%c0_56, %c0_57, %c0_58] : memref<1x64x32xbf16, #tpu.memory_space<vmem>>, vector<1x64x32xbf16>
    %162 = vector.shape_cast %161 : vector<1x64x32xbf16> to vector<64x32xbf16>
    %cst_59 = arith.constant dense<0.000000e+00> : vector<16x32xf32>
    %163 = tpu.matmul %160, %162, %cst_59 {dimension_numbers = #tpu.dot_dimension_numbers<[1], [0], [0], [1], [0, 0, 1, 1], [], []>} : vector<16x64xbf16>, vector<64x32xbf16>, vector<16x32xf32> -> vector<16x32xf32>
    %c0_60 = arith.constant 0 : index
    %c0_61 = arith.constant 0 : index
    %c0_62 = arith.constant 0 : index
    %164 = vector.load %arg11[%c0_60, %c0_61, %c0_62] : memref<1x1x32xf32, #tpu.memory_space<vmem>>, vector<1x1x32xf32>
    %165 = vector.shape_cast %164 : vector<1x1x32xf32> to vector<1x32xf32>
    %166 = vector.broadcast %165 : vector<1x32xf32> to vector<16x32xf32>
    %167 = arith.addf %163, %166 : vector<16x32xf32>
    %168 = arith.addf %149, %167 : vector<16x32xf32>
    %c0_63 = arith.constant 0 : index
    %c0_64 = arith.constant 0 : index
    %c0_65 = arith.constant 0 : index
    %169 = vector.load %arg12[%c0_63, %c0_64, %c0_65] : memref<1x1x32xf32, #tpu.memory_space<vmem>>, vector<1x1x32xf32>
    %170 = vector.shape_cast %169 : vector<1x1x32xf32> to vector<1x32xf32>
    %c0_66 = arith.constant 0 : index
    %c0_67 = arith.constant 0 : index
    %c0_68 = arith.constant 0 : index
    %171 = vector.load %arg13[%c0_66, %c0_67, %c0_68] : memref<1x1x32xf32, #tpu.memory_space<vmem>>, vector<1x1x32xf32>
    %172 = vector.shape_cast %171 : vector<1x1x32xf32> to vector<1x32xf32>
    %cst_69 = arith.constant dense<0.000000e+00> : vector<16xf32>
    %173 = vector.multi_reduction <add>, %168, %cst_69 [1] : vector<16x32xf32> to vector<16xf32>
    %174 = vector.shape_cast %173 : vector<16xf32> to vector<16x1xf32>
    %cst_70 = arith.constant 3.200000e+01 : f32
    %175 = vector.broadcast %cst_70 : f32 to vector<16x1xf32>
    %176 = arith.divf %174, %175 : vector<16x1xf32>
    %177 = vector.broadcast %176 : vector<16x1xf32> to vector<16x32xf32>
    %178 = arith.subf %168, %177 : vector<16x32xf32>
    %179 = arith.mulf %178, %178 : vector<16x32xf32>
    %cst_71 = arith.constant dense<0.000000e+00> : vector<16xf32>
    %180 = vector.multi_reduction <add>, %179, %cst_71 [1] : vector<16x32xf32> to vector<16xf32>
    %181 = vector.shape_cast %180 : vector<16xf32> to vector<16x1xf32>
    %cst_72 = arith.constant 3.200000e+01 : f32
    %182 = vector.broadcast %cst_72 : f32 to vector<16x1xf32>
    %183 = arith.divf %181, %182 : vector<16x1xf32>
    %184 = vector.broadcast %176 : vector<16x1xf32> to vector<16x32xf32>
    %185 = arith.subf %168, %184 : vector<16x32xf32>
    %cst_73 = arith.constant 9.99999974E-6 : f32
    %186 = vector.broadcast %cst_73 : f32 to vector<16x1xf32>
    %187 = arith.addf %183, %186 : vector<16x1xf32>
    %188 = math.rsqrt %187 : vector<16x1xf32>
    %189 = vector.broadcast %188 : vector<16x1xf32> to vector<16x32xf32>
    %190 = arith.mulf %185, %189 : vector<16x32xf32>
    %191 = vector.broadcast %170 : vector<1x32xf32> to vector<16x32xf32>
    %192 = arith.mulf %190, %191 : vector<16x32xf32>
    %193 = vector.broadcast %172 : vector<1x32xf32> to vector<16x32xf32>
    %194 = arith.addf %192, %193 : vector<16x32xf32>
    %c0_74 = arith.constant 0 : index
    %c0_75 = arith.constant 0 : index
    %195 = vector.load %arg19[%c0_74, %c0_75] : memref<16x32xf32, #tpu.memory_space<vmem>>, vector<16x32xf32>
    tpu.vector_store %arg19[%c0_74, %c0_75], %194 {strides = array<i32>} : memref<16x32xf32, #tpu.memory_space<vmem>>, vector<16x32xf32>,
    %c1_i32 = arith.constant 1 : i32
    %196 = arith.cmpi eq, %arg0, %c1_i32 : i32
    %197 = arith.extui %196 : i1 to i32
    %c0_i32_76 = arith.constant 0 : i32
    %198 = arith.cmpi ne, %197, %c0_i32_76 : i32
    scf.if %198 {
      %c0_77 = arith.constant 0 : index
      %c0_78 = arith.constant 0 : index
      %199 = vector.load %arg14[%c0_77, %c0_78] : memref<1x32xf32, #tpu.memory_space<vmem>>, vector<1x32xf32>
      %c0_79 = arith.constant 0 : index
      %c0_80 = arith.constant 0 : index
      %200 = vector.load %arg15[%c0_79, %c0_80] : memref<1x32xf32, #tpu.memory_space<vmem>>, vector<1x32xf32>
      %cst_81 = arith.constant dense<0.000000e+00> : vector<16xf32>
      %201 = vector.multi_reduction <add>, %194, %cst_81 [1] : vector<16x32xf32> to vector<16xf32>
      %202 = vector.shape_cast %201 : vector<16xf32> to vector<16x1xf32>
      %cst_82 = arith.constant 3.200000e+01 : f32
      %203 = vector.broadcast %cst_82 : f32 to vector<16x1xf32>
      %204 = arith.divf %202, %203 : vector<16x1xf32>
      %205 = vector.broadcast %204 : vector<16x1xf32> to vector<16x32xf32>
      %206 = arith.subf %194, %205 : vector<16x32xf32>
      %207 = arith.mulf %206, %206 : vector<16x32xf32>
      %cst_83 = arith.constant dense<0.000000e+00> : vector<16xf32>
      %208 = vector.multi_reduction <add>, %207, %cst_83 [1] : vector<16x32xf32> to vector<16xf32>
      %209 = vector.shape_cast %208 : vector<16xf32> to vector<16x1xf32>
      %cst_84 = arith.constant 3.200000e+01 : f32
      %210 = vector.broadcast %cst_84 : f32 to vector<16x1xf32>
      %211 = arith.divf %209, %210 : vector<16x1xf32>
      %212 = vector.broadcast %204 : vector<16x1xf32> to vector<16x32xf32>
      %213 = arith.subf %194, %212 : vector<16x32xf32>
      %cst_85 = arith.constant 9.99999974E-6 : f32
      %214 = vector.broadcast %cst_85 : f32 to vector<16x1xf32>
      %215 = arith.addf %211, %214 : vector<16x1xf32>
      %216 = math.rsqrt %215 : vector<16x1xf32>
      %217 = vector.broadcast %216 : vector<16x1xf32> to vector<16x32xf32>
      %218 = arith.mulf %213, %217 : vector<16x32xf32>
      %219 = vector.broadcast %199 : vector<1x32xf32> to vector<16x32xf32>
      %220 = arith.mulf %218, %219 : vector<16x32xf32>
      %221 = vector.broadcast %200 : vector<1x32xf32> to vector<16x32xf32>
      %222 = arith.addf %220, %221 : vector<16x32xf32>
      %223 = arith.truncf %222 : vector<16x32xf32> to vector<16x32xbf16>
      %c0_86 = arith.constant 0 : index
      %c0_87 = arith.constant 0 : index
      %224 = vector.load %arg16[%c0_86, %c0_87] : memref<32x128xbf16, #tpu.memory_space<vmem>>, vector<32x128xbf16>
      %cst_88 = arith.constant dense<0.000000e+00> : vector<16x128xf32>
      %225 = tpu.matmul %223, %224, %cst_88 {dimension_numbers = #tpu.dot_dimension_numbers<[1], [0], [0], [1], [0, 0, 1, 1], [], []>} : vector<16x32xbf16>, vector<32x128xbf16>, vector<16x128xf32> -> vector<16x128xf32>
      %c0_89 = arith.constant 0 : index
      %c0_90 = arith.constant 0 : index
      %226 = vector.load %arg17[%c0_89, %c0_90] : memref<1x128xf32, #tpu.memory_space<vmem>>, vector<1x128xf32>
      %227 = vector.broadcast %226 : vector<1x128xf32> to vector<16x128xf32>
      %228 = arith.addf %225, %227 : vector<16x128xf32>
      %c0_91 = arith.constant 0 : index
      %c0_92 = arith.constant 0 : index
      %229 = vector.load %arg18[%c0_91, %c0_92] : memref<16x128xf32, #tpu.memory_space<vmem>>, vector<16x128xf32>
      tpu.vector_store %arg18[%c0_91, %c0_92], %228 {strides = array<i32>} : memref<16x128xf32, #tpu.memory_space<vmem>>, vector<16x128xf32>,
    } else {
    }
    return
  }
  func.func @transform_0(%arg0: i32) -> (i32, i32) {
    %c0_i32 = arith.constant 0 : i32
    %c0_i32_0 = arith.constant 0 : i32
    %c0_i32_1 = arith.constant 0 : i32
    return %c0_i32, %c0_i32_0 : i32, i32
  }
  func.func @transform_1(%arg0: i32) -> (i32, i32, i32) {
    %c0_i32 = arith.constant 0 : i32
    %c0_i32_0 = arith.constant 0 : i32
    %c0_i32_1 = arith.constant 0 : i32
    return %arg0, %c0_i32, %c0_i32_0 : i32, i32, i32
  }
  func.func @transform_2(%arg0: i32) -> (i32, i32, i32) {
    %c0_i32 = arith.constant 0 : i32
    %c0_i32_0 = arith.constant 0 : i32
    %c0_i32_1 = arith.constant 0 : i32
    return %arg0, %c0_i32, %c0_i32_0 : i32, i32, i32
  }
  func.func @transform_3(%arg0: i32) -> (i32, i32, i32) {
    %c0_i32 = arith.constant 0 : i32
    %c0_i32_0 = arith.constant 0 : i32
    %c0_i32_1 = arith.constant 0 : i32
    return %arg0, %c0_i32, %c0_i32_0 : i32, i32, i32
  }
  func.func @transform_4(%arg0: i32) -> (i32, i32, i32) {
    %c0_i32 = arith.constant 0 : i32
    %c0_i32_0 = arith.constant 0 : i32
    %c0_i32_1 = arith.constant 0 : i32
    return %arg0, %c0_i32, %c0_i32_0 : i32, i32, i32
  }
  func.func @transform_5(%arg0: i32) -> (i32, i32, i32) {
    %c0_i32 = arith.constant 0 : i32
    %c0_i32_0 = arith.constant 0 : i32
    %c0_i32_1 = arith.constant 0 : i32
    return %arg0, %c0_i32, %c0_i32_0 : i32, i32, i32
  }
  func.func @transform_6(%arg0: i32) -> (i32, i32, i32) {
    %c0_i32 = arith.constant 0 : i32
    %c0_i32_0 = arith.constant 0 : i32
    %c0_i32_1 = arith.constant 0 : i32
    return %arg0, %c0_i32, %c0_i32_0 : i32, i32, i32
  }
  func.func @transform_7(%arg0: i32) -> (i32, i32, i32) {
    %c0_i32 = arith.constant 0 : i32
    %c0_i32_0 = arith.constant 0 : i32
    %c0_i32_1 = arith.constant 0 : i32
    return %arg0, %c0_i32, %c0_i32_0 : i32, i32, i32
  }
  func.func @transform_8(%arg0: i32) -> (i32, i32, i32) {
    %c0_i32 = arith.constant 0 : i32
    %c0_i32_0 = arith.constant 0 : i32
    %c0_i32_1 = arith.constant 0 : i32
    return %arg0, %c0_i32, %c0_i32_0 : i32, i32, i32
  }
  func.func @transform_9(%arg0: i32) -> (i32, i32, i32) {
    %c0_i32 = arith.constant 0 : i32
    %c0_i32_0 = arith.constant 0 : i32
    %c0_i32_1 = arith.constant 0 : i32
    return %arg0, %c0_i32, %c0_i32_0 : i32, i32, i32
  }
  func.func @transform_10(%arg0: i32) -> (i32, i32, i32) {
    %c0_i32 = arith.constant 0 : i32
    %c0_i32_0 = arith.constant 0 : i32
    %c0_i32_1 = arith.constant 0 : i32
    return %arg0, %c0_i32, %c0_i32_0 : i32, i32, i32
  }
  func.func @transform_11(%arg0: i32) -> (i32, i32, i32) {
    %c0_i32 = arith.constant 0 : i32
    %c0_i32_0 = arith.constant 0 : i32
    %c0_i32_1 = arith.constant 0 : i32
    return %arg0, %c0_i32, %c0_i32_0 : i32, i32, i32
  }
  func.func @transform_12(%arg0: i32) -> (i32, i32, i32) {
    %c0_i32 = arith.constant 0 : i32
    %c0_i32_0 = arith.constant 0 : i32
    %c0_i32_1 = arith.constant 0 : i32
    return %arg0, %c0_i32, %c0_i32_0 : i32, i32, i32
  }
  func.func @transform_13(%arg0: i32) -> (i32, i32) {
    %c0_i32 = arith.constant 0 : i32
    %c0_i32_0 = arith.constant 0 : i32
    %c0_i32_1 = arith.constant 0 : i32
    return %c0_i32, %c0_i32_0 : i32, i32
  }
  func.func @transform_14(%arg0: i32) -> (i32, i32) {
    %c0_i32 = arith.constant 0 : i32
    %c0_i32_0 = arith.constant 0 : i32
    %c0_i32_1 = arith.constant 0 : i32
    return %c0_i32, %c0_i32_0 : i32, i32
  }
  func.func @transform_15(%arg0: i32) -> (i32, i32) {
    %c0_i32 = arith.constant 0 : i32
    %c0_i32_0 = arith.constant 0 : i32
    %c0_i32_1 = arith.constant 0 : i32
    return %c0_i32, %c0_i32_0 : i32, i32
  }
  func.func @transform_16(%arg0: i32) -> (i32, i32) {
    %c0_i32 = arith.constant 0 : i32
    %c0_i32_0 = arith.constant 0 : i32
    %c0_i32_1 = arith.constant 0 : i32
    return %c0_i32, %c0_i32_0 : i32, i32
  }
  func.func @transform_17(%arg0: i32) -> (i32, i32) {
    %c0_i32 = arith.constant 0 : i32
    %c0_i32_0 = arith.constant 0 : i32
    %c0_i32_1 = arith.constant 0 : i32
    return %c0_i32, %c0_i32_0 : i32, i32
  }
}

</mosaic_0001>

<llo_original>
// kernel: tpu_custom_call.1
$region0: #{tpu_custom_call.1}
  #allocation0 [shape = 'u32[]', space=smem, size = 0x4, offset = 0x4, fixed_abs, tag = 'smem constant byte address 0x4 - core index']
  #allocation1 [shape = 'u32[72,128]{1,0:T(1,128)}', space=vmem, size = 0x9000, scoped, tag = 'internal scratch']
  #allocation2 [shape = 'f32[16,32]{1,0:T(8,128)}', space=vmem, size = 0x2000, scoped, tag = 'scratch operand']
  #allocation3 [shape = 'f32[16,32]{1,0:T(8,128)}', space=vmem, size = 0x2000, scoped, tag = 'scratch operand']
  %s0 = inlined_call_operand.hbm [shape: f32[16,32], index: 0, kind: input, shape index: {}]
  %s1 = inlined_call_operand.vmem [shape: bf16[2,32,96], index: 1, kind: input, shape index: {}]
  %s2 = inlined_call_operand.hbm [shape: f32[2,1,96], index: 2, kind: input, shape index: {}]
  %s3 = inlined_call_operand.vmem [shape: bf16[2,32,32], index: 3, kind: input, shape index: {}]
  %s4 = inlined_call_operand.vmem [shape: f32[2,1,32], index: 4, kind: input, shape index: {}]
  %s5 = inlined_call_operand.hbm [shape: f32[2,1,32], index: 5, kind: input, shape index: {}]
  %s6 = inlined_call_operand.vmem [shape: f32[2,1,32], index: 6, kind: input, shape index: {}]
  %s7 = inlined_call_operand.vmem [shape: bf16[2,32,64], index: 7, kind: input, shape index: {}]
  %s8 = inlined_call_operand.vmem [shape: f32[2,1,64], index: 8, kind: input, shape index: {}]
  %s9 = inlined_call_operand.vmem [shape: bf16[2,64,32], index: 9, kind: input, shape index: {}]
  %s10 = inlined_call_operand.vmem [shape: f32[2,1,32], index: 10, kind: input, shape index: {}]
  %s11 = inlined_call_operand.hbm [shape: f32[2,1,32], index: 11, kind: input, shape index: {}]
  %s12 = inlined_call_operand.vmem [shape: f32[2,1,32], index: 12, kind: input, shape index: {}]
  %s13 = inlined_call_operand.vmem [shape: f32[1,32], index: 13, kind: input, shape index: {}]
  %s14 = inlined_call_operand.vmem [shape: f32[1,32], index: 14, kind: input, shape index: {}]
  %s15 = inlined_call_operand.hbm [shape: bf16[32,128], index: 15, kind: input, shape index: {}]
  %s16 = inlined_call_operand.vmem [shape: f32[1,128], index: 16, kind: input, shape index: {}]
  %s17 = inlined_call_operand.hbm [shape: f32[16,128], index: 17, kind: output, shape index: {}]
  %s18 = sld [smem:[#allocation0]]
  $region129: #{tpu_custom_call.1} parent=0
    _
  %s20 = ssub.s32 1, %s18
  %s21 = scalar_select 0, %s20, %s18
  $region1: #{tpu_custom_call.1} parent=0
    #allocation4 [shape = 'u8[8192]{0}', space=vmem, size = 0x2000, scoped, tag = 'input window, operand 0, single buffered']
    #allocation5 [shape = 's32[2]{0}', space=sflag, size = 0x8, scoped, tag = 'scoped memory for tpu_custom_call.1']
    #allocation6 [shape = 's32[2]{0}', space=sflag, size = 0x8, scoped, tag = 'scoped memory for tpu_custom_call.1']
    #allocation7 [shape = 'u8[1024]{0}', space=vmem, size = 0x400, scoped, tag = 'input window, operand 2']
    #allocation8 [shape = 's32[2]{0}', space=sflag, size = 0x8, scoped, tag = 'scoped memory for tpu_custom_call.1']
    #allocation9 [shape = 'u8[1024]{0}', space=vmem, size = 0x400, scoped, tag = 'input window, operand 5']
    #allocation10 [shape = 'u8[1024]{0}', space=vmem, size = 0x400, scoped, tag = 'input window, operand 11']
    #allocation11 [shape = 's32[2]{0}', space=sflag, size = 0x8, scoped, tag = 'scoped memory for tpu_custom_call.1']
    #allocation12 [shape = 'u8[8192]{0}', space=vmem, size = 0x2000, scoped, tag = 'input window, operand 15, single buffered']
    #allocation13 [shape = 'u8[8192]{0}', space=vmem, size = 0x2000, scoped, tag = 'output window, operand 0, single buffered']
    %22 = vsyncpa [#allocation5], 0
    %23 = vsyncpa [#allocation8], 0
    %s24 = scalar_lea.sflag [#allocation8], 1
    %25 = vsyncpa %s24, 0
    %26 = vsyncpa [#allocation11], 0
    %s27 = scalar_lea.sflag [#allocation11], 1
    %28 = vsyncpa %s27, 0
    %29 = vsyncpa [#allocation6], 0
    loop: start=0, step=1, limit=4
    $region2: #{tpu_custom_call.1} parent=1 // loop_pre_header
      _
    $region3: #{tpu_custom_call.1} parent=1 // loop_header
      %s31 = sphi 0, %s35
      %p32 = scmp.ge.s32.totalorder %s31, 4
      %s39 = sphi 0, %s39
      %s41 = sphi 0, %s39
      %s42 = sphi 0, %s41
      %s56 = sphi 0, %s42
      %s62 = sphi 0, %s64
      %s65 = sphi 0, %s62
      %s66 = sphi 0, %s65
      %s82 = sphi 0, %s66
      %s88 = sphi 0, %s90
      %s91 = sphi 0, %s88
      %s92 = sphi 0, %s91
      %s108 = sphi 0, %s92
      %s114 = sphi 0, %s116
      %s117 = sphi 0, %s114
      %s118 = sphi 0, %s117
      %s134 = sphi 0, %s118
      %s140 = sphi 0, %s142
      %s143 = sphi 0, %s140
      %s144 = sphi 0, %s143
      %s160 = sphi 0, %s144
      %s166 = sphi 0, %s168
      %s169 = sphi 0, %s166
      %s170 = sphi 0, %s169
      %s186 = sphi 0, %s170
      %s192 = sphi 0, %s194
      %s195 = sphi 0, %s192
      %s196 = sphi 0, %s195
      %s212 = sphi 0, %s196
      %s218 = sphi 0, %s220
      %s221 = sphi 0, %s218
      %s222 = sphi 0, %s221
      %s238 = sphi 0, %s222
      %s244 = sphi 0, %s246
      %s247 = sphi 0, %s244
      %s248 = sphi 0, %s247
      %s264 = sphi 0, %s248
      %s270 = sphi 0, %s272
      %s273 = sphi 0, %s270
      %s274 = sphi 0, %s273
      %s290 = sphi 0, %s274
      %s296 = sphi 0, %s298
      %s299 = sphi 0, %s296
      %s300 = sphi 0, %s299
      %s316 = sphi 0, %s300
      %s322 = sphi 0, %s324
      %s325 = sphi 0, %s322
      %s326 = sphi 0, %s325
      %s342 = sphi 0, %s326
      %s348 = sphi 0, %s350
      %s351 = sphi 0, %s348
      %s352 = sphi 0, %s351
      %s368 = sphi 0, %s352
      %s372 = sphi 0, %s372
      %s374 = sphi 0, %s372
      %s375 = sphi 0, %s374
      %s389 = sphi 0, %s375
      %s393 = sphi 0, %s393
      %s395 = sphi 0, %s393
      %s396 = sphi 0, %s395
      %s410 = sphi 0, %s396
      %s414 = sphi 0, %s414
      %s416 = sphi 0, %s414
      %s417 = sphi 0, %s416
      %s431 = sphi 0, %s417
      %s435 = sphi 0, %s435
      %s437 = sphi 0, %s435
      %s438 = sphi 0, %s437
      %s452 = sphi 0, %s438
      %s456 = sphi 0, %s456
      %s458 = sphi 0, %s456
      %s459 = sphi 0, %s458
      %s473 = sphi 0, %s459
    $region4: #{tpu_custom_call.1} parent=1 // loop_header_branch
      %34 = sbr.rel (%p32) target = $region8
    $region5: #{tpu_custom_call.1} parent=1 // loop_body
      %s36 = ssub.s32 %s31, 1
      %s37 = ssub.s32 %s31, 2
      %s38 = sadd.s32 %s31, 1
      %s40 = sadd.s32 %s39, 1
      %p43 = scmp.eq.s32.totalorder %s31, 1
      %p44 = scmp.ne.s32.totalorder %s39, %s41
      %p45 = scmp.eq.s32.totalorder %s31, 0
      %p46 = por %p44, %p45
      %p47 = scmp.ne.s32.totalorder %s39, %s41
      %p48 = scmp.eq.s32.totalorder %s36, 1
      %p49 = por %p47, %p48
      %p50 = scmp.ne.s32.totalorder %s41, %s42
      %p51 = scmp.eq.s32.totalorder %s36, 0
      %p52 = por %p50, %p51
      %p53 = scmp.ne.s32.totalorder %s41, %s42
      %p54 = scmp.eq.s32.totalorder %s37, 1
      %p55 = por %p53, %p54
      %p57 = scmp.ne.s32.totalorder %s42, %s56
      %p58 = scmp.eq.s32.totalorder %s37, 0
      %p59 = por %p57, %p58
      %s60 = ssub.s32 %s31, %s38
      %p61 = scmp.eq.s32.totalorder %s60, 0
      %s63 = sadd.s32 %s62, 1
      %s64 = scalar_select %p61, %s62, %s63
      %p67 = pneg %p61
      %p68 = scmp.eq.s32.totalorder %s31, 1
      %p69 = por %p67, %p68
      %p70 = scmp.ne.s32.totalorder %s62, %s65
      %p71 = scmp.eq.s32.totalorder %s31, 0
      %p72 = por %p70, %p71
      %p73 = scmp.ne.s32.totalorder %s62, %s65
      %p74 = scmp.eq.s32.totalorder %s36, 1
      %p75 = por %p73, %p74
      %p76 = scmp.ne.s32.totalorder %s65, %s66
      %p77 = scmp.eq.s32.totalorder %s36, 0
      %p78 = por %p76, %p77
      %p79 = scmp.ne.s32.totalorder %s65, %s66
      %p80 = scmp.eq.s32.totalorder %s37, 1
      %p81 = por %p79, %p80
      %p83 = scmp.ne.s32.totalorder %s66, %s82
      %p84 = scmp.eq.s32.totalorder %s37, 0
      %p85 = por %p83, %p84
      %s86 = ssub.s32 %s31, %s38
      %p87 = scmp.eq.s32.totalorder %s86, 0
      %s89 = sadd.s32 %s88, 1
      %s90 = scalar_select %p87, %s88, %s89
      %p93 = pneg %p87
      %p94 = scmp.eq.s32.totalorder %s31, 1
      %p95 = por %p93, %p94
      %p96 = scmp.ne.s32.totalorder %s88, %s91
      %p97 = scmp.eq.s32.totalorder %s31, 0
      %p98 = por %p96, %p97
      %p99 = scmp.ne.s32.totalorder %s88, %s91
      %p100 = scmp.eq.s32.totalorder %s36, 1
      %p101 = por %p99, %p100
      %p102 = scmp.ne.s32.totalorder %s91, %s92
      %p103 = scmp.eq.s32.totalorder %s36, 0
      %p104 = por %p102, %p103
      %p105 = scmp.ne.s32.totalorder %s91, %s92
      %p106 = scmp.eq.s32.totalorder %s37, 1
      %p107 = por %p105, %p106
      %p109 = scmp.ne.s32.totalorder %s92, %s108
      %p110 = scmp.eq.s32.totalorder %s37, 0
      %p111 = por %p109, %p110
      %s112 = ssub.s32 %s31, %s38
      %p113 = scmp.eq.s32.totalorder %s112, 0
      %s115 = sadd.s32 %s114, 1
      %s116 = scalar_select %p113, %s114, %s115
      %p119 = pneg %p113
      %p120 = scmp.eq.s32.totalorder %s31, 1
      %p121 = por %p119, %p120
      %p122 = scmp.ne.s32.totalorder %s114, %s117
      %p123 = scmp.eq.s32.totalorder %s31, 0
      %p124 = por %p122, %p123
      %p125 = scmp.ne.s32.totalorder %s114, %s117
      %p126 = scmp.eq.s32.totalorder %s36, 1
      %p127 = por %p125, %p126
      %p128 = scmp.ne.s32.totalorder %s117, %s118
      %p129 = scmp.eq.s32.totalorder %s36, 0
      %p130 = por %p128, %p129
      %p131 = scmp.ne.s32.totalorder %s117, %s118
      %p132 = scmp.eq.s32.totalorder %s37, 1
      %p133 = por %p131, %p132
      %p135 = scmp.ne.s32.totalorder %s118, %s134
      %p136 = scmp.eq.s32.totalorder %s37, 0
      %p137 = por %p135, %p136
      %s138 = ssub.s32 %s31, %s38
      %p139 = scmp.eq.s32.totalorder %s138, 0
      %s141 = sadd.s32 %s140, 1
      %s142 = scalar_select %p139, %s140, %s141
      %p145 = pneg %p139
      %p146 = scmp.eq.s32.totalorder %s31, 1
      %p147 = por %p145, %p146
      %p148 = scmp.ne.s32.totalorder %s140, %s143
      %p149 = scmp.eq.s32.totalorder %s31, 0
      %p150 = por %p148, %p149
      %p151 = scmp.ne.s32.totalorder %s140, %s143
      %p152 = scmp.eq.s32.totalorder %s36, 1
      %p153 = por %p151, %p152
      %p154 = scmp.ne.s32.totalorder %s143, %s144
      %p155 = scmp.eq.s32.totalorder %s36, 0
      %p156 = por %p154, %p155
      %p157 = scmp.ne.s32.totalorder %s143, %s144
      %p158 = scmp.eq.s32.totalorder %s37, 1
      %p159 = por %p157, %p158
      %p161 = scmp.ne.s32.totalorder %s144, %s160
      %p162 = scmp.eq.s32.totalorder %s37, 0
      %p163 = por %p161, %p162
      %s164 = ssub.s32 %s31, %s38
      %p165 = scmp.eq.s32.totalorder %s164, 0
      %s167 = sadd.s32 %s166, 1
      %s168 = scalar_select %p165, %s166, %s167
      %p171 = pneg %p165
      %p172 = scmp.eq.s32.totalorder %s31, 1
      %p173 = por %p171, %p172
      %p174 = scmp.ne.s32.totalorder %s166, %s169
      %p175 = scmp.eq.s32.totalorder %s31, 0
      %p176 = por %p174, %p175
      %p177 = scmp.ne.s32.totalorder %s166, %s169
      %p178 = scmp.eq.s32.totalorder %s36, 1
      %p179 = por %p177, %p178
      %p180 = scmp.ne.s32.totalorder %s169, %s170
      %p181 = scmp.eq.s32.totalorder %s36, 0
      %p182 = por %p180, %p181
      %p183 = scmp.ne.s32.totalorder %s169, %s170
      %p184 = scmp.eq.s32.totalorder %s37, 1
      %p185 = por %p183, %p184
      %p187 = scmp.ne.s32.totalorder %s170, %s186
      %p188 = scmp.eq.s32.totalorder %s37, 0
      %p189 = por %p187, %p188
      %s190 = ssub.s32 %s31, %s38
      %p191 = scmp.eq.s32.totalorder %s190, 0
      %s193 = sadd.s32 %s192, 1
      %s194 = scalar_select %p191, %s192, %s193
      %p197 = pneg %p191
      %p198 = scmp.eq.s32.totalorder %s31, 1
      %p199 = por %p197, %p198
      %p200 = scmp.ne.s32.totalorder %s192, %s195
      %p201 = scmp.eq.s32.totalorder %s31, 0
      %p202 = por %p200, %p201
      %p203 = scmp.ne.s32.totalorder %s192, %s195
      %p204 = scmp.eq.s32.totalorder %s36, 1
      %p205 = por %p203, %p204
      %p206 = scmp.ne.s32.totalorder %s195, %s196
      %p207 = scmp.eq.s32.totalorder %s36, 0
      %p208 = por %p206, %p207
      %p209 = scmp.ne.s32.totalorder %s195, %s196
      %p210 = scmp.eq.s32.totalorder %s37, 1
      %p211 = por %p209, %p210
      %p213 = scmp.ne.s32.totalorder %s196, %s212
      %p214 = scmp.eq.s32.totalorder %s37, 0
      %p215 = por %p213, %p214
      %s216 = ssub.s32 %s31, %s38
      %p217 = scmp.eq.s32.totalorder %s216, 0
      %s219 = sadd.s32 %s218, 1
      %s220 = scalar_select %p217, %s218, %s219
      %p223 = pneg %p217
      %p224 = scmp.eq.s32.totalorder %s31, 1
      %p225 = por %p223, %p224
      %p226 = scmp.ne.s32.totalorder %s218, %s221
      %p227 = scmp.eq.s32.totalorder %s31, 0
      %p228 = por %p226, %p227
      %p229 = scmp.ne.s32.totalorder %s218, %s221
      %p230 = scmp.eq.s32.totalorder %s36, 1
      %p231 = por %p229, %p230
      %p232 = scmp.ne.s32.totalorder %s221, %s222
      %p233 = scmp.eq.s32.totalorder %s36, 0
      %p234 = por %p232, %p233
      %p235 = scmp.ne.s32.totalorder %s221, %s222
      %p236 = scmp.eq.s32.totalorder %s37, 1
      %p237 = por %p235, %p236
      %p239 = scmp.ne.s32.totalorder %s222, %s238
      %p240 = scmp.eq.s32.totalorder %s37, 0
      %p241 = por %p239, %p240
      %s242 = ssub.s32 %s31, %s38
      %p243 = scmp.eq.s32.totalorder %s242, 0
      %s245 = sadd.s32 %s244, 1
      %s246 = scalar_select %p243, %s244, %s245
      %p249 = pneg %p243
      %p250 = scmp.eq.s32.totalorder %s31, 1
      %p251 = por %p249, %p250
      %p252 = scmp.ne.s32.totalorder %s244, %s247
      %p253 = scmp.eq.s32.totalorder %s31, 0
      %p254 = por %p252, %p253
      %p255 = scmp.ne.s32.totalorder %s244, %s247
      %p256 = scmp.eq.s32.totalorder %s36, 1
      %p257 = por %p255, %p256
      %p258 = scmp.ne.s32.totalorder %s247, %s248
      %p259 = scmp.eq.s32.totalorder %s36, 0
      %p260 = por %p258, %p259
      %p261 = scmp.ne.s32.totalorder %s247, %s248
      %p262 = scmp.eq.s32.totalorder %s37, 1
      %p263 = por %p261, %p262
      %p265 = scmp.ne.s32.totalorder %s248, %s264
      %p266 = scmp.eq.s32.totalorder %s37, 0
      %p267 = por %p265, %p266
      %s268 = ssub.s32 %s31, %s38
      %p269 = scmp.eq.s32.totalorder %s268, 0
      %s271 = sadd.s32 %s270, 1
      %s272 = scalar_select %p269, %s270, %s271
      %p275 = pneg %p269
      %p276 = scmp.eq.s32.totalorder %s31, 1
      %p277 = por %p275, %p276
      %p278 = scmp.ne.s32.totalorder %s270, %s273
      %p279 = scmp.eq.s32.totalorder %s31, 0
      %p280 = por %p278, %p279
      %p281 = scmp.ne.s32.totalorder %s270, %s273
      %p282 = scmp.eq.s32.totalorder %s36, 1
      %p283 = por %p281, %p282
      %p284 = scmp.ne.s32.totalorder %s273, %s274
      %p285 = scmp.eq.s32.totalorder %s36, 0
      %p286 = por %p284, %p285
      %p287 = scmp.ne.s32.totalorder %s273, %s274
      %p288 = scmp.eq.s32.totalorder %s37, 1
      %p289 = por %p287, %p288
      %p291 = scmp.ne.s32.totalorder %s274, %s290
      %p292 = scmp.eq.s32.totalorder %s37, 0
      %p293 = por %p291, %p292
      %s294 = ssub.s32 %s31, %s38
      %p295 = scmp.eq.s32.totalorder %s294, 0
      %s297 = sadd.s32 %s296, 1
      %s298 = scalar_select %p295, %s296, %s297
      %p301 = pneg %p295
      %p302 = scmp.eq.s32.totalorder %s31, 1
      %p303 = por %p301, %p302
      %p304 = scmp.ne.s32.totalorder %s296, %s299
      %p305 = scmp.eq.s32.totalorder %s31, 0
      %p306 = por %p304, %p305
      %p307 = scmp.ne.s32.totalorder %s296, %s299
      %p308 = scmp.eq.s32.totalorder %s36, 1
      %p309 = por %p307, %p308
      %p310 = scmp.ne.s32.totalorder %s299, %s300
      %p311 = scmp.eq.s32.totalorder %s36, 0
      %p312 = por %p310, %p311
      %p313 = scmp.ne.s32.totalorder %s299, %s300
      %p314 = scmp.eq.s32.totalorder %s37, 1
      %p315 = por %p313, %p314
      %p317 = scmp.ne.s32.totalorder %s300, %s316
      %p318 = scmp.eq.s32.totalorder %s37, 0
      %p319 = por %p317, %p318
      %s320 = ssub.s32 %s31, %s38
      %p321 = scmp.eq.s32.totalorder %s320, 0
      %s323 = sadd.s32 %s322, 1
      %s324 = scalar_select %p321, %s322, %s323
      %p327 = pneg %p321
      %p328 = scmp.eq.s32.totalorder %s31, 1
      %p329 = por %p327, %p328
      %p330 = scmp.ne.s32.totalorder %s322, %s325
      %p331 = scmp.eq.s32.totalorder %s31, 0
      %p332 = por %p330, %p331
      %p333 = scmp.ne.s32.totalorder %s322, %s325
      %p334 = scmp.eq.s32.totalorder %s36, 1
      %p335 = por %p333, %p334
      %p336 = scmp.ne.s32.totalorder %s325, %s326
      %p337 = scmp.eq.s32.totalorder %s36, 0
      %p338 = por %p336, %p337
      %p339 = scmp.ne.s32.totalorder %s325, %s326
      %p340 = scmp.eq.s32.totalorder %s37, 1
      %p341 = por %p339, %p340
      %p343 = scmp.ne.s32.totalorder %s326, %s342
      %p344 = scmp.eq.s32.totalorder %s37, 0
      %p345 = por %p343, %p344
      %s346 = ssub.s32 %s31, %s38
      %p347 = scmp.eq.s32.totalorder %s346, 0
      %s349 = sadd.s32 %s348, 1
      %s350 = scalar_select %p347, %s348, %s349
      %p353 = pneg %p347
      %p354 = scmp.eq.s32.totalorder %s31, 1
      %p355 = por %p353, %p354
      %p356 = scmp.ne.s32.totalorder %s348, %s351
      %p357 = scmp.eq.s32.totalorder %s31, 0
      %p358 = por %p356, %p357
      %p359 = scmp.ne.s32.totalorder %s348, %s351
      %p360 = scmp.eq.s32.totalorder %s36, 1
      %p361 = por %p359, %p360
      %p362 = scmp.ne.s32.totalorder %s351, %s352
      %p363 = scmp.eq.s32.totalorder %s36, 0
      %p364 = por %p362, %p363
      %p365 = scmp.ne.s32.totalorder %s351, %s352
      %p366 = scmp.eq.s32.totalorder %s37, 1
      %p367 = por %p365, %p366
      %p369 = scmp.ne.s32.totalorder %s352, %s368
      %p370 = scmp.eq.s32.totalorder %s37, 0
      %p371 = por %p369, %p370
      %s373 = sadd.s32 %s372, 1
      %p376 = scmp.eq.s32.totalorder %s31, 1
      %p377 = scmp.ne.s32.totalorder %s372, %s374
      %p378 = scmp.eq.s32.totalorder %s31, 0
      %p379 = por %p377, %p378
      %p380 = scmp.ne.s32.totalorder %s372, %s374
      %p381 = scmp.eq.s32.totalorder %s36, 1
      %p382 = por %p380, %p381
      %p383 = scmp.ne.s32.totalorder %s374, %s375
      %p384 = scmp.eq.s32.totalorder %s36, 0
      %p385 = por %p383, %p384
      %p386 = scmp.ne.s32.totalorder %s374, %s375
      %p387 = scmp.eq.s32.totalorder %s37, 1
      %p388 = por %p386, %p387
      %p390 = scmp.ne.s32.totalorder %s375, %s389
      %p391 = scmp.eq.s32.totalorder %s37, 0
      %p392 = por %p390, %p391
      %s394 = sadd.s32 %s393, 1
      %p397 = scmp.eq.s32.totalorder %s31, 1
      %p398 = scmp.ne.s32.totalorder %s393, %s395
      %p399 = scmp.eq.s32.totalorder %s31, 0
      %p400 = por %p398, %p399
      %p401 = scmp.ne.s32.totalorder %s393, %s395
      %p402 = scmp.eq.s32.totalorder %s36, 1
      %p403 = por %p401, %p402
      %p404 = scmp.ne.s32.totalorder %s395, %s396
      %p405 = scmp.eq.s32.totalorder %s36, 0
      %p406 = por %p404, %p405
      %p407 = scmp.ne.s32.totalorder %s395, %s396
      %p408 = scmp.eq.s32.totalorder %s37, 1
      %p409 = por %p407, %p408
      %p411 = scmp.ne.s32.totalorder %s396, %s410
      %p412 = scmp.eq.s32.totalorder %s37, 0
      %p413 = por %p411, %p412
      %s415 = sadd.s32 %s414, 1
      %p418 = scmp.eq.s32.totalorder %s31, 1
      %p419 = scmp.ne.s32.totalorder %s414, %s416
      %p420 = scmp.eq.s32.totalorder %s31, 0
      %p421 = por %p419, %p420
      %p422 = scmp.ne.s32.totalorder %s414, %s416
      %p423 = scmp.eq.s32.totalorder %s36, 1
      %p424 = por %p422, %p423
      %p425 = scmp.ne.s32.totalorder %s416, %s417
      %p426 = scmp.eq.s32.totalorder %s36, 0
      %p427 = por %p425, %p426
      %p428 = scmp.ne.s32.totalorder %s416, %s417
      %p429 = scmp.eq.s32.totalorder %s37, 1
      %p430 = por %p428, %p429
      %p432 = scmp.ne.s32.totalorder %s417, %s431
      %p433 = scmp.eq.s32.totalorder %s37, 0
      %p434 = por %p432, %p433
      %s436 = sadd.s32 %s435, 1
      %p439 = scmp.eq.s32.totalorder %s31, 1
      %p440 = scmp.ne.s32.totalorder %s435, %s437
      %p441 = scmp.eq.s32.totalorder %s31, 0
      %p442 = por %p440, %p441
      %p443 = scmp.ne.s32.totalorder %s435, %s437
      %p444 = scmp.eq.s32.totalorder %s36, 1
      %p445 = por %p443, %p444
      %p446 = scmp.ne.s32.totalorder %s437, %s438
      %p447 = scmp.eq.s32.totalorder %s36, 0
      %p448 = por %p446, %p447
      %p449 = scmp.ne.s32.totalorder %s437, %s438
      %p450 = scmp.eq.s32.totalorder %s37, 1
      %p451 = por %p449, %p450
      %p453 = scmp.ne.s32.totalorder %s438, %s452
      %p454 = scmp.eq.s32.totalorder %s37, 0
      %p455 = por %p453, %p454
      %s457 = sadd.s32 %s456, 1
      %p460 = scmp.eq.s32.totalorder %s31, 1
      %p461 = scmp.ne.s32.totalorder %s456, %s458
      %p462 = scmp.eq.s32.totalorder %s31, 0
      %p463 = por %p461, %p462
      %p464 = scmp.ne.s32.totalorder %s456, %s458
      %p465 = scmp.eq.s32.totalorder %s36, 1
      %p466 = por %p464, %p465
      %p467 = scmp.ne.s32.totalorder %s458, %s459
      %p468 = scmp.eq.s32.totalorder %s36, 0
      %p469 = por %p467, %p468
      %p470 = scmp.ne.s32.totalorder %s458, %s459
      %p471 = scmp.eq.s32.totalorder %s37, 1
      %p472 = por %p470, %p471
      %p474 = scmp.ne.s32.totalorder %s459, %s473
      %p475 = scmp.eq.s32.totalorder %s37, 0
      %p476 = por %p474, %p475
      %p477 = scmp.le.s32.totalorder 1, %s31
      %p478 = scmp.lt.s32.totalorder %s31, 3
      %p479 = pnand %p477, %p478
      %p480 = pneg %p479
      // Predicated region
      $region9: #{tpu_custom_call.1} parent=5 // pred_check
        _
      $region10: #{tpu_custom_call.1} parent=5 // pred_check_branch
        %482 = sbr.rel (%p479) target = $region12
      $region11: #{tpu_custom_call.1} parent=5 // pred_region
        %s483 = ssub.s32 %s31, 1
        // Predicated region
        $region13: #{tpu_custom_call.1} parent=11 // pred_check
          %p484 = pneg %p52
        $region14: #{tpu_custom_call.1} parent=11 // pred_check_branch
          %486 = sbr.rel (%p484) target = $region16
        $region15: #{tpu_custom_call.1} parent=11 // pred_region
          %488 = vsyncadd [#allocation5], 0
          %s489 = sshll.u32 %s0, 4
          %s490 = int_to_ptr.hbm [resolvable:$true] %s489
          %s491 = sshll.u32 [#allocation4], 4
          %s492 = int_to_ptr.vmem [resolvable:$true] %s491
          %497 = dma.hbm_to_vmem [thread:$0]  %s490, 256, %s492, [#allocation5], 128, 128, 8
        $region16: #{tpu_custom_call.1} parent=11 // pred_fallthru
          _
        // Predicated region
        $region17: #{tpu_custom_call.1} parent=11 // pred_check
          %p498 = pneg %p385
        $region18: #{tpu_custom_call.1} parent=11 // pred_check_branch
          %500 = sbr.rel (%p498) target = $region20
        $region19: #{tpu_custom_call.1} parent=11 // pred_region
          _
        $region20: #{tpu_custom_call.1} parent=11 // pred_fallthru
          _
        // Predicated region
        $region21: #{tpu_custom_call.1} parent=11 // pred_check
          %p501 = pneg %p406
        $region22: #{tpu_custom_call.1} parent=11 // pred_check_branch
          %503 = sbr.rel (%p501) target = $region24
        $region23: #{tpu_custom_call.1} parent=11 // pred_region
          _
        $region24: #{tpu_custom_call.1} parent=11 // pred_fallthru
          _
        // Predicated region
        $region25: #{tpu_custom_call.1} parent=11 // pred_check
          %p504 = pneg %p427
        $region26: #{tpu_custom_call.1} parent=11 // pred_check_branch
          %506 = sbr.rel (%p504) target = $region28
        $region27: #{tpu_custom_call.1} parent=11 // pred_region
          %508 = vsyncadd [#allocation11], 0
          %s509 = sshll.u32 %s15, 4
          %s510 = int_to_ptr.hbm [resolvable:$true] %s509
          %s511 = sshll.u32 [#allocation12], 4
          %s512 = int_to_ptr.vmem [resolvable:$true] %s511
          %517 = dma.hbm_to_vmem [thread:$0]  %s510, 256, %s512, [#allocation11], 64, 64, 4
        $region28: #{tpu_custom_call.1} parent=11 // pred_fallthru
          _
        // Predicated region
        $region29: #{tpu_custom_call.1} parent=11 // pred_check
          %p518 = pneg %p448
        $region30: #{tpu_custom_call.1} parent=11 // pred_check_branch
          %520 = sbr.rel (%p518) target = $region32
        $region31: #{tpu_custom_call.1} parent=11 // pred_region
          _
        $region32: #{tpu_custom_call.1} parent=11 // pred_fallthru
          _
      $region12: #{tpu_custom_call.1} parent=5 // pred_fallthru
        _
      %p521 = scmp.lt.s32.totalorder %s31, 2
      // Predicated region
      $region33: #{tpu_custom_call.1} parent=5 // pred_check
        %p522 = pneg %p521
      $region34: #{tpu_custom_call.1} parent=5 // pred_check_branch
        %524 = sbr.rel (%p522) target = $region36
      $region35: #{tpu_custom_call.1} parent=5 // pred_region
        // Predicated region
        $region37: #{tpu_custom_call.1} parent=35 // pred_check
          %p525 = pneg %p72
        $region38: #{tpu_custom_call.1} parent=35 // pred_check_branch
          %527 = sbr.rel (%p525) target = $region40
        $region39: #{tpu_custom_call.1} parent=35 // pred_region
          %p528 = scmp.lt.s32.totalorder %s31, 1
          %s529 = scalar_select %p528, %s31, 1
          %s530 = smul.addr %s529, 4
          %s531 = smul.addr %s530, 4
          %s532 = scalar_lea.vmem %s1, %s531
        $region40: #{tpu_custom_call.1} parent=35 // pred_fallthru
          _
        // Predicated region
        $region41: #{tpu_custom_call.1} parent=35 // pred_check
          %p533 = pneg %p98
        $region42: #{tpu_custom_call.1} parent=35 // pred_check_branch
          %535 = sbr.rel (%p533) target = $region44
        $region43: #{tpu_custom_call.1} parent=35 // pred_region
          %s536 = sand.u32 %s31, 1
          %s537 = scalar_lea.sflag [#allocation8], %s536
          %s538 = sand.u32 %s88, 1
          %s539 = scalar_lea.vmem [#allocation7], %s538
          %541 = vsyncadd %s537, 0
          %s542 = scalar_lea.hbm %s2, %s31
          %s544 = sshll.u32 %s542, 4
          %s545 = int_to_ptr.hbm [resolvable:$true] %s544
          %s546 = sshll.u32 %s539, 4
          %s547 = int_to_ptr.vmem [resolvable:$true] %s546
          %549 = dma.hbm_to_vmem [thread:$0]  %s545, 16, %s547, %s537
        $region44: #{tpu_custom_call.1} parent=35 // pred_fallthru
          _
        // Predicated region
        $region45: #{tpu_custom_call.1} parent=35 // pred_check
          %p550 = pneg %p124
        $region46: #{tpu_custom_call.1} parent=35 // pred_check_branch
          %552 = sbr.rel (%p550) target = $region48
        $region47: #{tpu_custom_call.1} parent=35 // pred_region
          %p553 = scmp.lt.s32.totalorder %s31, 1
          %s554 = scalar_select %p553, %s31, 1
          %s555 = smul.addr %s554, 4
          %s556 = smul.addr %s555, 4
          %s557 = scalar_lea.vmem %s3, %s556
        $region48: #{tpu_custom_call.1} parent=35 // pred_fallthru
          _
        // Predicated region
        $region49: #{tpu_custom_call.1} parent=35 // pred_check
          %p558 = pneg %p150
        $region50: #{tpu_custom_call.1} parent=35 // pred_check_branch
          %560 = sbr.rel (%p558) target = $region52
        $region51: #{tpu_custom_call.1} parent=35 // pred_region
          %p561 = scmp.lt.s32.totalorder %s31, 1
          %s562 = scalar_select %p561, %s31, 1
          %s563 = scalar_lea.vmem %s4, %s562
        $region52: #{tpu_custom_call.1} parent=35 // pred_fallthru
          _
        // Predicated region
        $region53: #{tpu_custom_call.1} parent=35 // pred_check
          %p564 = pneg %p176
        $region54: #{tpu_custom_call.1} parent=35 // pred_check_branch
          %566 = sbr.rel (%p564) target = $region56
        $region55: #{tpu_custom_call.1} parent=35 // pred_region
          %s567 = sand.u32 %s31, 1
          %s568 = scalar_lea.sflag [#allocation8], %s567
          %s569 = sand.u32 %s166, 1
          %s570 = scalar_lea.vmem [#allocation9], %s569
          %572 = vsyncadd %s568, 0
          %s573 = scalar_lea.hbm %s5, %s31
          %s575 = sshll.u32 %s573, 4
          %s576 = int_to_ptr.hbm [resolvable:$true] %s575
          %s577 = sshll.u32 %s570, 4
          %s578 = int_to_ptr.vmem [resolvable:$true] %s577
          %580 = dma.hbm_to_vmem [thread:$0]  %s576, 16, %s578, %s568
        $region56: #{tpu_custom_call.1} parent=35 // pred_fallthru
          _
        // Predicated region
        $region57: #{tpu_custom_call.1} parent=35 // pred_check
          %p581 = pneg %p202
        $region58: #{tpu_custom_call.1} parent=35 // pred_check_branch
          %583 = sbr.rel (%p581) target = $region60
        $region59: #{tpu_custom_call.1} parent=35 // pred_region
          %p584 = scmp.lt.s32.totalorder %s31, 1
          %s585 = scalar_select %p584, %s31, 1
          %s586 = scalar_lea.vmem %s6, %s585
        $region60: #{tpu_custom_call.1} parent=35 // pred_fallthru
          _
        // Predicated region
        $region61: #{tpu_custom_call.1} parent=35 // pred_check
          %p587 = pneg %p228
        $region62: #{tpu_custom_call.1} parent=35 // pred_check_branch
          %589 = sbr.rel (%p587) target = $region64
        $region63: #{tpu_custom_call.1} parent=35 // pred_region
          %p590 = scmp.lt.s32.totalorder %s31, 1
          %s591 = scalar_select %p590, %s31, 1
          %s592 = smul.addr %s591, 4
          %s593 = smul.addr %s592, 4
          %s594 = scalar_lea.vmem %s7, %s593
        $region64: #{tpu_custom_call.1} parent=35 // pred_fallthru
          _
        // Predicated region
        $region65: #{tpu_custom_call.1} parent=35 // pred_check
          %p595 = pneg %p254
        $region66: #{tpu_custom_call.1} parent=35 // pred_check_branch
          %597 = sbr.rel (%p595) target = $region68
        $region67: #{tpu_custom_call.1} parent=35 // pred_region
          %p598 = scmp.lt.s32.totalorder %s31, 1
          %s599 = scalar_select %p598, %s31, 1
          %s600 = scalar_lea.vmem %s8, %s599
        $region68: #{tpu_custom_call.1} parent=35 // pred_fallthru
          _
        // Predicated region
        $region69: #{tpu_custom_call.1} parent=35 // pred_check
          %p601 = pneg %p280
        $region70: #{tpu_custom_call.1} parent=35 // pred_check_branch
          %603 = sbr.rel (%p601) target = $region72
        $region71: #{tpu_custom_call.1} parent=35 // pred_region
          %p604 = scmp.lt.s32.totalorder %s31, 1
          %s605 = scalar_select %p604, %s31, 1
          %s606 = smul.addr %s605, 8
          %s607 = smul.addr %s606, 4
          %s608 = scalar_lea.vmem %s9, %s607
        $region72: #{tpu_custom_call.1} parent=35 // pred_fallthru
          _
        // Predicated region
        $region73: #{tpu_custom_call.1} parent=35 // pred_check
          %p609 = pneg %p306
        $region74: #{tpu_custom_call.1} parent=35 // pred_check_branch
          %611 = sbr.rel (%p609) target = $region76
        $region75: #{tpu_custom_call.1} parent=35 // pred_region
          %p612 = scmp.lt.s32.totalorder %s31, 1
          %s613 = scalar_select %p612, %s31, 1
          %s614 = scalar_lea.vmem %s10, %s613
        $region76: #{tpu_custom_call.1} parent=35 // pred_fallthru
          _
        // Predicated region
        $region77: #{tpu_custom_call.1} parent=35 // pred_check
          %p615 = pneg %p332
        $region78: #{tpu_custom_call.1} parent=35 // pred_check_branch
          %617 = sbr.rel (%p615) target = $region80
        $region79: #{tpu_custom_call.1} parent=35 // pred_region
          %s618 = sand.u32 %s31, 1
          %s619 = scalar_lea.sflag [#allocation11], %s618
          %s620 = sand.u32 %s322, 1
          %s621 = scalar_lea.vmem [#allocation10], %s620
          %623 = vsyncadd %s619, 0
          %s624 = scalar_lea.hbm %s11, %s31
          %s626 = sshll.u32 %s624, 4
          %s627 = int_to_ptr.hbm [resolvable:$true] %s626
          %s628 = sshll.u32 %s621, 4
          %s629 = int_to_ptr.vmem [resolvable:$true] %s628
          %631 = dma.hbm_to_vmem [thread:$0]  %s627, 16, %s629, %s619
        $region80: #{tpu_custom_call.1} parent=35 // pred_fallthru
          _
        // Predicated region
        $region81: #{tpu_custom_call.1} parent=35 // pred_check
          %p632 = pneg %p358
        $region82: #{tpu_custom_call.1} parent=35 // pred_check_branch
          %634 = sbr.rel (%p632) target = $region84
        $region83: #{tpu_custom_call.1} parent=35 // pred_region
          %p635 = scmp.lt.s32.totalorder %s31, 1
          %s636 = scalar_select %p635, %s31, 1
          %s637 = scalar_lea.vmem %s12, %s636
        $region84: #{tpu_custom_call.1} parent=35 // pred_fallthru
          _
      $region36: #{tpu_custom_call.1} parent=5 // pred_fallthru
        _
      %p638 = scmp.le.s32.totalorder 1, %s31
      %p639 = scmp.lt.s32.totalorder %s31, 3
      %p640 = pnand %p638, %p639
      %p641 = pneg %p640
      // Predicated region
      $region85: #{tpu_custom_call.1} parent=5 // pred_check
        _
      $region86: #{tpu_custom_call.1} parent=5 // pred_check_branch
        %643 = sbr.rel (%p640) target = $region88
      $region87: #{tpu_custom_call.1} parent=5 // pred_region
        %s644 = ssub.s32 %s31, 1
        // Predicated region
        $region89: #{tpu_custom_call.1} parent=87 // pred_check
          %p645 = pneg %p52
        $region90: #{tpu_custom_call.1} parent=87 // pred_check_branch
          %647 = sbr.rel (%p645) target = $region92
        $region91: #{tpu_custom_call.1} parent=87 // pred_region
          %649 = dma.done [#allocation5], 256
        $region92: #{tpu_custom_call.1} parent=87 // pred_fallthru
          _
        %s650 = sand.u32 %s36, 1
        %s651 = scalar_lea.sflag [#allocation8], %s650
        %s652 = sand.u32 %s91, 1
        %s653 = scalar_lea.vmem [#allocation7], %s652
        // Predicated region
        $region93: #{tpu_custom_call.1} parent=87 // pred_check
          %p654 = pneg %p104
        $region94: #{tpu_custom_call.1} parent=87 // pred_check_branch
          %656 = sbr.rel (%p654) target = $region96
        $region95: #{tpu_custom_call.1} parent=87 // pred_region
          %658 = dma.done %s651, 16
        $region96: #{tpu_custom_call.1} parent=87 // pred_fallthru
          _
        %s659 = sand.u32 %s36, 1
        %s660 = scalar_lea.sflag [#allocation8], %s659
        %s661 = sand.u32 %s169, 1
        %s662 = scalar_lea.vmem [#allocation9], %s661
        // Predicated region
        $region97: #{tpu_custom_call.1} parent=87 // pred_check
          %p663 = pneg %p182
        $region98: #{tpu_custom_call.1} parent=87 // pred_check_branch
          %665 = sbr.rel (%p663) target = $region100
        $region99: #{tpu_custom_call.1} parent=87 // pred_region
          %667 = dma.done %s660, 16
        $region100: #{tpu_custom_call.1} parent=87 // pred_fallthru
          _
        %s668 = sand.u32 %s36, 1
        %s669 = scalar_lea.sflag [#allocation11], %s668
        %s670 = sand.u32 %s325, 1
        %s671 = scalar_lea.vmem [#allocation10], %s670
        // Predicated region
        $region101: #{tpu_custom_call.1} parent=87 // pred_check
          %p672 = pneg %p338
        $region102: #{tpu_custom_call.1} parent=87 // pred_check_branch
          %674 = sbr.rel (%p672) target = $region104
        $region103: #{tpu_custom_call.1} parent=87 // pred_region
          %676 = dma.done %s669, 16
        $region104: #{tpu_custom_call.1} parent=87 // pred_fallthru
          _
        // Predicated region
        $region105: #{tpu_custom_call.1} parent=87 // pred_check
          %p677 = pneg %p427
        $region106: #{tpu_custom_call.1} parent=87 // pred_check_branch
          %679 = sbr.rel (%p677) target = $region108
        $region107: #{tpu_custom_call.1} parent=87 // pred_region
          %681 = dma.done [#allocation11], 256
        $region108: #{tpu_custom_call.1} parent=87 // pred_fallthru
          _
        %p682 = pneg %p52
        %p683 = pneg %p49
        %p684 = scmp.lt.s32.totalorder %s36, 1
        %s685 = scalar_select %p684, %s36, 1
        %s686 = smul.addr %s685, 4
        %s687 = smul.addr %s686, 4
        %s688 = scalar_lea.vmem %s1, %s687
        %p689 = pneg %p78
        %p690 = pneg %p75
        %s691 = sand.u32 %s36, 1
        %s692 = scalar_lea.sflag [#allocation8], %s691
        %s693 = sand.u32 %s91, 1
        %s694 = scalar_lea.vmem [#allocation7], %s693
        %p695 = pneg %p104
        %p696 = pneg %p101
        %p697 = scmp.lt.s32.totalorder %s36, 1
        %s698 = scalar_select %p697, %s36, 1
        %s699 = smul.addr %s698, 4
        %s700 = smul.addr %s699, 4
        %s701 = scalar_lea.vmem %s3, %s700
        %p702 = pneg %p130
        %p703 = pneg %p127
        %p704 = scmp.lt.s32.totalorder %s36, 1
        %s705 = scalar_select %p704, %s36, 1
        %s706 = scalar_lea.vmem %s4, %s705
        %p707 = pneg %p156
        %p708 = pneg %p153
        %s709 = sand.u32 %s36, 1
        %s710 = scalar_lea.sflag [#allocation8], %s709
        %s711 = sand.u32 %s169, 1
        %s712 = scalar_lea.vmem [#allocation9], %s711
        %p713 = pneg %p182
        %p714 = pneg %p179
        %p715 = scmp.lt.s32.totalorder %s36, 1
        %s716 = scalar_select %p715, %s36, 1
        %s717 = scalar_lea.vmem %s6, %s716
        %p718 = pneg %p208
        %p719 = pneg %p205
        %p720 = scmp.lt.s32.totalorder %s36, 1
        %s721 = scalar_select %p720, %s36, 1
        %s722 = smul.addr %s721, 4
        %s723 = smul.addr %s722, 4
        %s724 = scalar_lea.vmem %s7, %s723
        %p725 = pneg %p234
        %p726 = pneg %p231
        %p727 = scmp.lt.s32.totalorder %s36, 1
        %s728 = scalar_select %p727, %s36, 1
        %s729 = scalar_lea.vmem %s8, %s728
        %p730 = pneg %p260
        %p731 = pneg %p257
        %p732 = scmp.lt.s32.totalorder %s36, 1
        %s733 = scalar_select %p732, %s36, 1
        %s734 = smul.addr %s733, 8
        %s735 = smul.addr %s734, 4
        %s736 = scalar_lea.vmem %s9, %s735
        %p737 = pneg %p286
        %p738 = pneg %p283
        %p739 = scmp.lt.s32.totalorder %s36, 1
        %s740 = scalar_select %p739, %s36, 1
        %s741 = scalar_lea.vmem %s10, %s740
        %p742 = pneg %p312
        %p743 = pneg %p309
        %s744 = sand.u32 %s36, 1
        %s745 = scalar_lea.sflag [#allocation11], %s744
        %s746 = sand.u32 %s325, 1
        %s747 = scalar_lea.vmem [#allocation10], %s746
        %p748 = pneg %p338
        %p749 = pneg %p335
        %p750 = scmp.lt.s32.totalorder %s36, 1
        %s751 = scalar_select %p750, %s36, 1
        %s752 = scalar_lea.vmem %s12, %s751
        %p753 = pneg %p364
        %p754 = pneg %p361
        %p755 = pneg %p385
        %p756 = pneg %p382
        %p757 = pneg %p406
        %p758 = pneg %p403
        %p759 = pneg %p427
        %p760 = pneg %p424
        %p761 = pneg %p448
        %p762 = pneg %p445
        %p763 = pneg %p469
        %p764 = pneg %p466
        %p765 = scmp.lt.s32.totalorder %s36, 1
        %s766 = scalar_select %p765, %s36, 1
        %s767 = smul.addr %s766, 4
        %s768 = smul.addr %s767, 4
        %s769 = scalar_lea.vmem %s1, %s768
        %p770 = scmp.lt.s32.totalorder %s36, 1
        %s771 = scalar_select %p770, %s36, 1
        %s772 = smul.addr %s771, 4
        %s773 = smul.addr %s772, 4
        %s774 = scalar_lea.vmem %s3, %s773
        %p775 = scmp.lt.s32.totalorder %s36, 1
        %s776 = scalar_select %p775, %s36, 1
        %s777 = scalar_lea.vmem %s4, %s776
        %p778 = scmp.lt.s32.totalorder %s36, 1
        %s779 = scalar_select %p778, %s36, 1
        %s780 = scalar_lea.vmem %s6, %s779
        %p781 = scmp.lt.s32.totalorder %s36, 1
        %s782 = scalar_select %p781, %s36, 1
        %s783 = smul.addr %s782, 4
        %s784 = smul.addr %s783, 4
        %s785 = scalar_lea.vmem %s7, %s784
        %p786 = scmp.lt.s32.totalorder %s36, 1
        %s787 = scalar_select %p786, %s36, 1
        %s788 = scalar_lea.vmem %s8, %s787
        %p789 = scmp.lt.s32.totalorder %s36, 1
        %s790 = scalar_select %p789, %s36, 1
        %s791 = smul.addr %s790, 8
        %s792 = smul.addr %s791, 4
        %s793 = scalar_lea.vmem %s9, %s792
        %p794 = scmp.lt.s32.totalorder %s36, 1
        %s795 = scalar_select %p794, %s36, 1
        %s796 = scalar_lea.vmem %s10, %s795
        %p797 = scmp.lt.s32.totalorder %s36, 1
        %s798 = scalar_select %p797, %s36, 1
        %s799 = scalar_lea.vmem %s12, %s798
        %p801 = scmp.eq.s32.totalorder %s36, 0
        // Predicated region
        $region109: #{tpu_custom_call.1} parent=87 // pred_check
          %p802 = pneg %p801
        $region110: #{tpu_custom_call.1} parent=87 // pred_check_branch
          %804 = sbr.rel (%p802) target = $region112
        $region111: #{tpu_custom_call.1} parent=87 // pred_region
          %v805 = vld [vmem:[#allocation4] sm:$0xff]
          %v806 = vld [vmem:[#allocation4 + $0x8] sm:$0xff]
          %vm807 = vcmask 261120
          %808 = vst.msk [vmem:[#allocation2] sm:$0xff] %vm807, %v805
          %809 = vst.msk [vmem:[#allocation2 + $0x8] sm:$0xff] %vm807, %v806
        $region112: #{tpu_custom_call.1} parent=87 // pred_fallthru
          _
        %v810 = vld [vmem:[#allocation2] sm:$0xff]
        %v811 = vld [vmem:[#allocation2 + $0x8] sm:$0xff]
        %v812 = vpack.c.bf16 %v811, %v810
        %v813 = vld [vmem:[%s769] sm:$0xf]
        %v814 = vld [vmem:[%s769 + $0x4] sm:$0xf]
        %v815 = vld [vmem:[%s769 + $0x8] sm:$0xf]
        %v816 = vld [vmem:[%s769 + $0xc] sm:$0xf]
        %v817 = vld [vmem:[%s653] sm:$0x1]
        %v819 = vperm.slane %v817, 0
        %v825 = vunpack.c.l.b16 %v813
        %v826 = vunpack.c.l.b16 %v814
        %v827 = vunpack.c.l.b16 %v815
        %v828 = vunpack.c.l.b16 %v816
        %v829 = vpack.c.b16 %v826, %v825
        %v830 = vpack.c.b16 %v828, %v827
        %vm833 = vcmask 261120
        %v835 = vsel %vm833, %v812, 0
        %837 = vmatpush.bf16.msra.mxu0 0
        %838 = vmatpush.bf16.msra.mxu0 0
        %839 = vmatpush.bf16.msra.mxu0 0
        %840 = vmatpush.bf16.msra.mxu0 0
        %841 = vmatpush.bf16.msra.mxu0 0
        %842 = vmatpush.bf16.msra.mxu0 0
        %843 = vmatpush.bf16.msra.mxu0 %v830
        %844 = vmatpush.bf16.msra.mxu0 %v829
        %845 = vmatmul.bf16.gmra.mxu0 %v835
        %v846 = vpop.f32.mrf.mxu0
        %v847 = vadd.f32 %v819, %v846
        %v848 = vpop.f32.mrf.mxu0
        %v849 = vadd.f32 %v819, %v848
        %850 = vdwg.mxu0
        %852 = vrot.lane.b32.xlu0 %v847, 120
        %v853 = vpop.permute.xlu0 %852
        %855 = vrot.lane.b32.xlu0 %v847, 112
        %v856 = vpop.permute.xlu0 %855
        %858 = vrot.lane.b32.xlu0 %v847, 104
        %v859 = vpop.permute.xlu0 %858
        %862 = vrot.lane.b32.xlu0 %v849, 120
        %v863 = vpop.permute.xlu0 %862
        %865 = vrot.lane.b32.xlu0 %v849, 112
        %v866 = vpop.permute.xlu0 %865
        %868 = vrot.lane.b32.xlu0 %v849, 104
        %v869 = vpop.permute.xlu0 %868
        %v871 = vmul.f32 %v847, 0.35355338
        %v872 = vmul.f32 %v853, 0.35355338
        %v873 = vmul.f32 %v856, 0.35355338
        %v874 = vmul.f32 %v859, 0.35355338
        %v875 = vmul.f32 %v849, 0.35355338
        %v876 = vmul.f32 %v863, 0.35355338
        %v877 = vmul.f32 %v866, 0.35355338
        %v878 = vmul.f32 %v869, 0.35355338
        %v879 = vlaneseq
        %v880 = vshrl.u32 %v879, 7
        %v881 = vlaneseq
        %v882 = vand.u32 %v881, 127
        %vm883 = vcmp.le.s32.totalorder %v882, %v880
        %v884 = vsel %vm883, 0.0, -1e+09
        %v885 = vpack.c.bf16 %v871, %v871
        %v886 = vpack.c.bf16 %v872, %v872
        %v887 = vpack.c.bf16 %v873, %v873
        %v888 = vpack.c.bf16 %v874, %v874
        %v889 = vpack.c.bf16 %v875, %v875
        %v890 = vpack.c.bf16 %v876, %v876
        %v891 = vpack.c.bf16 %v877, %v877
        %v892 = vpack.c.bf16 %v878, %v878
        %v893 = vpack.c.bf16 %v847, %v847
        %v894 = vpack.c.bf16 %v853, %v853
        %v895 = vpack.c.bf16 %v856, %v856
        %v896 = vpack.c.bf16 %v859, %v859
        %v897 = vpack.c.bf16 %v849, %v849
        %v898 = vpack.c.bf16 %v863, %v863
        %v899 = vpack.c.bf16 %v866, %v866
        %v900 = vpack.c.bf16 %v869, %v869
        %v902 = vunpack.c.l.b16 %v893
        %v903 = vpack.c.b16 %v902, %v902
        %904 = vrot.lane.b32.xlu0 %v903, 96
        %v905 = vpop.permute.xlu0 %904
        %vm906 = vcmask 64512
        %v908 = vsel %vm906, %v885, 0
        %v911 = vsel %vm906, %v905, 0
        %913 = vmatpush.bf16.xpose.msra.mxu0 0
        %914 = vmatpush.bf16.xpose.msra.mxu0 0
        %915 = vmatpush.bf16.xpose.msra.mxu0 0
        %916 = vmatpush.bf16.xpose.msra.mxu0 0
        %917 = vmatpush.bf16.xpose.msra.mxu0 0
        %918 = vmatpush.bf16.xpose.msra.mxu0 0
        %919 = vmatpush.bf16.xpose.msra.mxu0 0
        %920 = vmatpush.bf16.xpose.msra.mxu0 %v911
        %921 = vmatmul.bf16.gmra.mxu0 %v908
        %v922 = vpop.f32.mrf.mxu0
        %v923 = vadd.f32 %v884, %v922
        %v924 = vpop.f32.mrf.mxu0
        %925 = vdwg.mxu0
        %v927 = vunpack.c.l.b16 %v894
        %v928 = vpack.c.b16 %v927, %v927
        %929 = vrot.lane.b32.xlu0 %v928, 96
        %v930 = vpop.permute.xlu0 %929
        %v932 = vsel %vm906, %v886, 0
        %v935 = vsel %vm906, %v930, 0
        %937 = vmatpush.bf16.xpose.msra.mxu0 0
        %938 = vmatpush.bf16.xpose.msra.mxu0 0
        %939 = vmatpush.bf16.xpose.msra.mxu0 0
        %940 = vmatpush.bf16.xpose.msra.mxu0 0
        %941 = vmatpush.bf16.xpose.msra.mxu0 0
        %942 = vmatpush.bf16.xpose.msra.mxu0 0
        %943 = vmatpush.bf16.xpose.msra.mxu0 0
        %944 = vmatpush.bf16.xpose.msra.mxu0 %v935
        %945 = vmatmul.bf16.gmra.mxu0 %v932
        %v946 = vpop.f32.mrf.mxu0
        %v947 = vadd.f32 %v884, %v946
        %v948 = vpop.f32.mrf.mxu0
        %949 = vdwg.mxu0
        %v951 = vunpack.c.l.b16 %v895
        %v952 = vpack.c.b16 %v951, %v951
        %953 = vrot.lane.b32.xlu0 %v952, 96
        %v954 = vpop.permute.xlu0 %953
        %v956 = vsel %vm906, %v887, 0
        %v959 = vsel %vm906, %v954, 0
        %961 = vmatpush.bf16.xpose.msra.mxu0 0
        %962 = vmatpush.bf16.xpose.msra.mxu0 0
        %963 = vmatpush.bf16.xpose.msra.mxu0 0
        %964 = vmatpush.bf16.xpose.msra.mxu0 0
        %965 = vmatpush.bf16.xpose.msra.mxu0 0
        %966 = vmatpush.bf16.xpose.msra.mxu0 0
        %967 = vmatpush.bf16.xpose.msra.mxu0 0
        %968 = vmatpush.bf16.xpose.msra.mxu0 %v959
        %969 = vmatmul.bf16.gmra.mxu0 %v956
        %v970 = vpop.f32.mrf.mxu0
        %v971 = vadd.f32 %v884, %v970
        %v972 = vpop.f32.mrf.mxu0
        %973 = vdwg.mxu0
        %v975 = vunpack.c.l.b16 %v896
        %v976 = vpack.c.b16 %v975, %v975
        %977 = vrot.lane.b32.xlu0 %v976, 96
        %v978 = vpop.permute.xlu0 %977
        %v980 = vsel %vm906, %v888, 0
        %v983 = vsel %vm906, %v978, 0
        %985 = vmatpush.bf16.xpose.msra.mxu0 0
        %986 = vmatpush.bf16.xpose.msra.mxu0 0
        %987 = vmatpush.bf16.xpose.msra.mxu0 0
        %988 = vmatpush.bf16.xpose.msra.mxu0 0
        %989 = vmatpush.bf16.xpose.msra.mxu0 0
        %990 = vmatpush.bf16.xpose.msra.mxu0 0
        %991 = vmatpush.bf16.xpose.msra.mxu0 0
        %992 = vmatpush.bf16.xpose.msra.mxu0 %v983
        %993 = vmatmul.bf16.gmra.mxu0 %v980
        %v994 = vpop.f32.mrf.mxu0
        %v995 = vadd.f32 %v884, %v994
        %v996 = vpop.f32.mrf.mxu0
        %997 = vdwg.mxu0
        %v999 = vunpack.c.l.b16 %v897
        %v1000 = vpack.c.b16 %v999, %v999
        %1001 = vrot.lane.b32.xlu0 %v1000, 96
        %v1002 = vpop.permute.xlu0 %1001
        %v1004 = vsel %vm906, %v889, 0
        %v1007 = vsel %vm906, %v1002, 0
        %1009 = vmatpush.bf16.xpose.msra.mxu0 0
        %1010 = vmatpush.bf16.xpose.msra.mxu0 0
        %1011 = vmatpush.bf16.xpose.msra.mxu0 0
        %1012 = vmatpush.bf16.xpose.msra.mxu0 0
        %1013 = vmatpush.bf16.xpose.msra.mxu0 0
        %1014 = vmatpush.bf16.xpose.msra.mxu0 0
        %1015 = vmatpush.bf16.xpose.msra.mxu0 0
        %1016 = vmatpush.bf16.xpose.msra.mxu0 %v1007
        %1017 = vmatmul.bf16.gmra.mxu0 %v1004
        %v1018 = vpop.f32.mrf.mxu0
        %v1019 = vadd.f32 %v884, %v1018
        %v1020 = vpop.f32.mrf.mxu0
        %1021 = vdwg.mxu0
        %v1023 = vunpack.c.l.b16 %v898
        %v1024 = vpack.c.b16 %v1023, %v1023
        %1025 = vrot.lane.b32.xlu0 %v1024, 96
        %v1026 = vpop.permute.xlu0 %1025
        %v1028 = vsel %vm906, %v890, 0
        %v1031 = vsel %vm906, %v1026, 0
        %1033 = vmatpush.bf16.xpose.msra.mxu0 0
        %1034 = vmatpush.bf16.xpose.msra.mxu0 0
        %1035 = vmatpush.bf16.xpose.msra.mxu0 0
        %1036 = vmatpush.bf16.xpose.msra.mxu0 0
        %1037 = vmatpush.bf16.xpose.msra.mxu0 0
        %1038 = vmatpush.bf16.xpose.msra.mxu0 0
        %1039 = vmatpush.bf16.xpose.msra.mxu0 0
        %1040 = vmatpush.bf16.xpose.msra.mxu0 %v1031
        %1041 = vmatmul.bf16.gmra.mxu0 %v1028
        %v1042 = vpop.f32.mrf.mxu0
        %v1043 = vadd.f32 %v884, %v1042
        %v1044 = vpop.f32.mrf.mxu0
        %1045 = vdwg.mxu0
        %v1047 = vunpack.c.l.b16 %v899
        %v1048 = vpack.c.b16 %v1047, %v1047
        %1049 = vrot.lane.b32.xlu0 %v1048, 96
        %v1050 = vpop.permute.xlu0 %1049
        %v1052 = vsel %vm906, %v891, 0
        %v1055 = vsel %vm906, %v1050, 0
        %1057 = vmatpush.bf16.xpose.msra.mxu0 0
        %1058 = vmatpush.bf16.xpose.msra.mxu0 0
        %1059 = vmatpush.bf16.xpose.msra.mxu0 0
        %1060 = vmatpush.bf16.xpose.msra.mxu0 0
        %1061 = vmatpush.bf16.xpose.msra.mxu0 0
        %1062 = vmatpush.bf16.xpose.msra.mxu0 0
        %1063 = vmatpush.bf16.xpose.msra.mxu0 0
        %1064 = vmatpush.bf16.xpose.msra.mxu0 %v1055
        %1065 = vmatmul.bf16.gmra.mxu0 %v1052
        %v1066 = vpop.f32.mrf.mxu0
        %v1067 = vadd.f32 %v884, %v1066
        %v1068 = vpop.f32.mrf.mxu0
        %1069 = vdwg.mxu0
        %v1071 = vunpack.c.l.b16 %v900
        %v1072 = vpack.c.b16 %v1071, %v1071
        %1073 = vrot.lane.b32.xlu0 %v1072, 96
        %v1074 = vpop.permute.xlu0 %1073
        %v1076 = vsel %vm906, %v892, 0
        %v1079 = vsel %vm906, %v1074, 0
        %1081 = vmatpush.bf16.xpose.msra.mxu0 0
        %1082 = vmatpush.bf16.xpose.msra.mxu0 0
        %1083 = vmatpush.bf16.xpose.msra.mxu0 0
        %1084 = vmatpush.bf16.xpose.msra.mxu0 0
        %1085 = vmatpush.bf16.xpose.msra.mxu0 0
        %1086 = vmatpush.bf16.xpose.msra.mxu0 0
        %1087 = vmatpush.bf16.xpose.msra.mxu0 0
        %1088 = vmatpush.bf16.xpose.msra.mxu0 %v1079
        %1089 = vmatmul.bf16.gmra.mxu0 %v1076
        %v1090 = vpop.f32.mrf.mxu0
        %v1091 = vadd.f32 %v884, %v1090
        %v1092 = vpop.f32.mrf.mxu0
        %1093 = vdwg.mxu0
        %v1094 = vsel %vm906, %v923, -inf
        %1095 = vmax.xlane.f32.xlu0 %v1094
        %v1096 = vpop.xlane.xlu0 %1095
        %v1097 = vsel %vm906, %v947, -inf
        %1098 = vmax.xlane.f32.xlu0 %v1097
        %v1099 = vpop.xlane.xlu0 %1098
        %v1100 = vsel %vm906, %v971, -inf
        %1101 = vmax.xlane.f32.xlu0 %v1100
        %v1102 = vpop.xlane.xlu0 %1101
        %v1103 = vsel %vm906, %v995, -inf
        %1104 = vmax.xlane.f32.xlu0 %v1103
        %v1105 = vpop.xlane.xlu0 %1104
        %v1106 = vsel %vm906, %v1019, -inf
        %1107 = vmax.xlane.f32.xlu0 %v1106
        %v1108 = vpop.xlane.xlu0 %1107
        %v1109 = vsel %vm906, %v1043, -inf
        %1110 = vmax.xlane.f32.xlu0 %v1109
        %v1111 = vpop.xlane.xlu0 %1110
        %v1112 = vsel %vm906, %v1067, -inf
        %1113 = vmax.xlane.f32.xlu0 %v1112
        %v1114 = vpop.xlane.xlu0 %1113
        %v1115 = vsel %vm906, %v1091, -inf
        %1116 = vmax.xlane.f32.xlu0 %v1115
        %v1117 = vpop.xlane.xlu0 %1116
        %v1118 = vsub.f32 %v923, %v1096
        %v1119 = vsub.f32 %v947, %v1099
        %v1120 = vsub.f32 %v971, %v1102
        %v1121 = vsub.f32 %v995, %v1105
        %v1122 = vsub.f32 %v1019, %v1108
        %v1123 = vsub.f32 %v1043, %v1111
        %v1124 = vsub.f32 %v1067, %v1114
        %v1125 = vsub.f32 %v1091, %v1117
        %v1126 = vmul.f32 %v1118, 1.442695
        %v1127 = vpow.pop %v1126
        %v1128 = vmul.f32 %v1119, 1.442695
        %v1129 = vpow.pop %v1128
        %v1130 = vmul.f32 %v1120, 1.442695
        %v1131 = vpow.pop %v1130
        %v1132 = vmul.f32 %v1121, 1.442695
        %v1133 = vpow.pop %v1132
        %v1134 = vmul.f32 %v1122, 1.442695
        %v1135 = vpow.pop %v1134
        %v1136 = vmul.f32 %v1123, 1.442695
        %v1137 = vpow.pop %v1136
        %v1138 = vmul.f32 %v1124, 1.442695
        %v1139 = vpow.pop %v1138
        %v1140 = vmul.f32 %v1125, 1.442695
        %v1141 = vpow.pop %v1140
        %v1142 = vsel %vm906, %v1127, 0.0
        %1143 = vadd.xlane.f32.xlu0 %v1142
        %v1144 = vpop.xlane.xlu0 %1143
        %v1145 = vsel %vm906, %v1129, 0.0
        %1146 = vadd.xlane.f32.xlu0 %v1145
        %v1147 = vpop.xlane.xlu0 %1146
        %v1148 = vsel %vm906, %v1131, 0.0
        %1149 = vadd.xlane.f32.xlu0 %v1148
        %v1150 = vpop.xlane.xlu0 %1149
        %v1151 = vsel %vm906, %v1133, 0.0
        %1152 = vadd.xlane.f32.xlu0 %v1151
        %v1153 = vpop.xlane.xlu0 %1152
        %v1154 = vsel %vm906, %v1135, 0.0
        %1155 = vadd.xlane.f32.xlu0 %v1154
        %v1156 = vpop.xlane.xlu0 %1155
        %v1157 = vsel %vm906, %v1137, 0.0
        %1158 = vadd.xlane.f32.xlu0 %v1157
        %v1159 = vpop.xlane.xlu0 %1158
        %v1160 = vsel %vm906, %v1139, 0.0
        %1161 = vadd.xlane.f32.xlu0 %v1160
        %v1162 = vpop.xlane.xlu0 %1161
        %v1163 = vsel %vm906, %v1141, 0.0
        %1164 = vadd.xlane.f32.xlu0 %v1163
        %v1165 = vpop.xlane.xlu0 %1164
        %v1166 = vrcp.pop %v1144
        %v1167 = vrcp.pop %v1147
        %v1168 = vrcp.pop %v1150
        %v1169 = vrcp.pop %v1153
        %v1170 = vrcp.pop %v1156
        %v1171 = vrcp.pop %v1159
        %v1172 = vrcp.pop %v1162
        %v1173 = vrcp.pop %v1165
        %v1174 = vmul.f32 %v1127, %v1166
        %v1175 = vmul.f32 %v1129, %v1167
        %v1176 = vmul.f32 %v1131, %v1168
        %v1177 = vmul.f32 %v1133, %v1169
        %v1178 = vmul.f32 %v1135, %v1170
        %v1179 = vmul.f32 %v1137, %v1171
        %v1180 = vmul.f32 %v1139, %v1172
        %v1181 = vmul.f32 %v1141, %v1173
        %v1182 = vpack.c.bf16 %v1174, %v1174
        %v1183 = vpack.c.bf16 %v1175, %v1175
        %v1184 = vpack.c.bf16 %v1176, %v1176
        %v1185 = vpack.c.bf16 %v1177, %v1177
        %v1186 = vpack.c.bf16 %v1178, %v1178
        %v1187 = vpack.c.bf16 %v1179, %v1179
        %v1188 = vpack.c.bf16 %v1180, %v1180
        %v1189 = vpack.c.bf16 %v1181, %v1181
        %1190 = vrot.lane.b32.xlu0 %v903, 64
        %v1191 = vpop.permute.xlu0 %1190
        %v1193 = vsel %vm906, %v1182, 0
        %vm1195 = vcmask 1043456
        %v1197 = vsel %vm1195, %v1191, 0
        %1199 = vmatpush.bf16.msra.mxu0 0
        %1200 = vmatpush.bf16.msra.mxu0 0
        %1201 = vmatpush.bf16.msra.mxu0 0
        %1202 = vmatpush.bf16.msra.mxu0 0
        %1203 = vmatpush.bf16.msra.mxu0 0
        %1204 = vmatpush.bf16.msra.mxu0 0
        %1205 = vmatpush.bf16.msra.mxu0 0
        %1206 = vmatpush.bf16.msra.mxu0 %v1197
        %1207 = vmatmul.bf16.gmra.mxu0 %v1193
        %v1208 = vpop.f32.mrf.mxu0
        %v1209 = vadd.f32 0.0, %v1208
        %v1210 = vpop.f32.mrf.mxu0
        %1211 = vdwg.mxu0
        %1212 = vrot.lane.b32.xlu0 %v928, 64
        %v1213 = vpop.permute.xlu0 %1212
        %v1215 = vsel %vm906, %v1183, 0
        %v1218 = vsel %vm1195, %v1213, 0
        %1220 = vmatpush.bf16.msra.mxu0 0
        %1221 = vmatpush.bf16.msra.mxu0 0
        %1222 = vmatpush.bf16.msra.mxu0 0
        %1223 = vmatpush.bf16.msra.mxu0 0
        %1224 = vmatpush.bf16.msra.mxu0 0
        %1225 = vmatpush.bf16.msra.mxu0 0
        %1226 = vmatpush.bf16.msra.mxu0 0
        %1227 = vmatpush.bf16.msra.mxu0 %v1218
        %1228 = vmatmul.bf16.gmra.mxu0 %v1215
        %v1229 = vpop.f32.mrf.mxu0
        %v1230 = vadd.f32 0.0, %v1229
        %v1231 = vpop.f32.mrf.mxu0
        %1232 = vdwg.mxu0
        %1233 = vrot.lane.b32.xlu0 %v952, 64
        %v1234 = vpop.permute.xlu0 %1233
        %v1236 = vsel %vm906, %v1184, 0
        %v1239 = vsel %vm1195, %v1234, 0
        %1241 = vmatpush.bf16.msra.mxu0 0
        %1242 = vmatpush.bf16.msra.mxu0 0
        %1243 = vmatpush.bf16.msra.mxu0 0
        %1244 = vmatpush.bf16.msra.mxu0 0
        %1245 = vmatpush.bf16.msra.mxu0 0
        %1246 = vmatpush.bf16.msra.mxu0 0
        %1247 = vmatpush.bf16.msra.mxu0 0
        %1248 = vmatpush.bf16.msra.mxu0 %v1239
        %1249 = vmatmul.bf16.gmra.mxu0 %v1236
        %v1250 = vpop.f32.mrf.mxu0
        %v1251 = vadd.f32 0.0, %v1250
        %v1252 = vpop.f32.mrf.mxu0
        %1253 = vdwg.mxu0
        %1254 = vrot.lane.b32.xlu0 %v976, 64
        %v1255 = vpop.permute.xlu0 %1254
        %v1257 = vsel %vm906, %v1185, 0
        %v1260 = vsel %vm1195, %v1255, 0
        %1262 = vmatpush.bf16.msra.mxu0 0
        %1263 = vmatpush.bf16.msra.mxu0 0
        %1264 = vmatpush.bf16.msra.mxu0 0
        %1265 = vmatpush.bf16.msra.mxu0 0
        %1266 = vmatpush.bf16.msra.mxu0 0
        %1267 = vmatpush.bf16.msra.mxu0 0
        %1268 = vmatpush.bf16.msra.mxu0 0
        %1269 = vmatpush.bf16.msra.mxu0 %v1260
        %1270 = vmatmul.bf16.gmra.mxu0 %v1257
        %v1271 = vpop.f32.mrf.mxu0
        %v1272 = vadd.f32 0.0, %v1271
        %v1273 = vpop.f32.mrf.mxu0
        %1274 = vdwg.mxu0
        %1275 = vrot.lane.b32.xlu0 %v1000, 64
        %v1276 = vpop.permute.xlu0 %1275
        %v1278 = vsel %vm906, %v1186, 0
        %v1281 = vsel %vm1195, %v1276, 0
        %1283 = vmatpush.bf16.msra.mxu0 0
        %1284 = vmatpush.bf16.msra.mxu0 0
        %1285 = vmatpush.bf16.msra.mxu0 0
        %1286 = vmatpush.bf16.msra.mxu0 0
        %1287 = vmatpush.bf16.msra.mxu0 0
        %1288 = vmatpush.bf16.msra.mxu0 0
        %1289 = vmatpush.bf16.msra.mxu0 0
        %1290 = vmatpush.bf16.msra.mxu0 %v1281
        %1291 = vmatmul.bf16.gmra.mxu0 %v1278
        %v1292 = vpop.f32.mrf.mxu0
        %v1293 = vadd.f32 0.0, %v1292
        %v1294 = vpop.f32.mrf.mxu0
        %1295 = vdwg.mxu0
        %1296 = vrot.lane.b32.xlu0 %v1024, 64
        %v1297 = vpop.permute.xlu0 %1296
        %v1299 = vsel %vm906, %v1187, 0
        %v1302 = vsel %vm1195, %v1297, 0
        %1304 = vmatpush.bf16.msra.mxu0 0
        %1305 = vmatpush.bf16.msra.mxu0 0
        %1306 = vmatpush.bf16.msra.mxu0 0
        %1307 = vmatpush.bf16.msra.mxu0 0
        %1308 = vmatpush.bf16.msra.mxu0 0
        %1309 = vmatpush.bf16.msra.mxu0 0
        %1310 = vmatpush.bf16.msra.mxu0 0
        %1311 = vmatpush.bf16.msra.mxu0 %v1302
        %1312 = vmatmul.bf16.gmra.mxu0 %v1299
        %v1313 = vpop.f32.mrf.mxu0
        %v1314 = vadd.f32 0.0, %v1313
        %v1315 = vpop.f32.mrf.mxu0
        %1316 = vdwg.mxu0
        %1317 = vrot.lane.b32.xlu0 %v1048, 64
        %v1318 = vpop.permute.xlu0 %1317
        %v1320 = vsel %vm906, %v1188, 0
        %v1323 = vsel %vm1195, %v1318, 0
        %1325 = vmatpush.bf16.msra.mxu0 0
        %1326 = vmatpush.bf16.msra.mxu0 0
        %1327 = vmatpush.bf16.msra.mxu0 0
        %1328 = vmatpush.bf16.msra.mxu0 0
        %1329 = vmatpush.bf16.msra.mxu0 0
        %1330 = vmatpush.bf16.msra.mxu0 0
        %1331 = vmatpush.bf16.msra.mxu0 0
        %1332 = vmatpush.bf16.msra.mxu0 %v1323
        %1333 = vmatmul.bf16.gmra.mxu0 %v1320
        %v1334 = vpop.f32.mrf.mxu0
        %v1335 = vadd.f32 0.0, %v1334
        %v1336 = vpop.f32.mrf.mxu0
        %1337 = vdwg.mxu0
        %1338 = vrot.lane.b32.xlu0 %v1072, 64
        %v1339 = vpop.permute.xlu0 %1338
        %v1341 = vsel %vm906, %v1189, 0
        %v1344 = vsel %vm1195, %v1339, 0
        %1346 = vmatpush.bf16.msra.mxu0 0
        %1347 = vmatpush.bf16.msra.mxu0 0
        %1348 = vmatpush.bf16.msra.mxu0 0
        %1349 = vmatpush.bf16.msra.mxu0 0
        %1350 = vmatpush.bf16.msra.mxu0 0
        %1351 = vmatpush.bf16.msra.mxu0 0
        %1352 = vmatpush.bf16.msra.mxu0 0
        %1353 = vmatpush.bf16.msra.mxu0 %v1344
        %1354 = vmatmul.bf16.gmra.mxu0 %v1341
        %v1355 = vpop.f32.mrf.mxu0
        %v1356 = vadd.f32 0.0, %v1355
        %v1357 = vpop.f32.mrf.mxu0
        %1358 = vdwg.mxu0
        %1359 = vst.msk [vmem:[#allocation3] sm:$0xff] %vm906, %v1209
        %1361 = vrot.lane.b32.xlu0 %v1230, 8
        %v1362 = vpop.permute.xlu0 %1361
        %vm1364 = vcmask 130112
        %1365 = vst.msk [vmem:[#allocation3] sm:$0xff] %vm1364, %v1362
        %1367 = vrot.lane.b32.xlu0 %v1251, 16
        %v1368 = vpop.permute.xlu0 %1367
        %vm1370 = vcmask 195712
        %1371 = vst.msk [vmem:[#allocation3] sm:$0xff] %vm1370, %v1368
        %1373 = vrot.lane.b32.xlu0 %v1272, 24
        %v1374 = vpop.permute.xlu0 %1373
        %vm1376 = vcmask 261312
        %1377 = vst.msk [vmem:[#allocation3] sm:$0xff] %vm1376, %v1374
        %1378 = vst.msk [vmem:[#allocation3 + $0x8] sm:$0xff] %vm906, %v1293
        %1380 = vrot.lane.b32.xlu0 %v1314, 8
        %v1381 = vpop.permute.xlu0 %1380
        %1383 = vst.msk [vmem:[#allocation3 + $0x8] sm:$0xff] %vm1364, %v1381
        %1385 = vrot.lane.b32.xlu0 %v1335, 16
        %v1386 = vpop.permute.xlu0 %1385
        %1388 = vst.msk [vmem:[#allocation3 + $0x8] sm:$0xff] %vm1370, %v1386
        %1390 = vrot.lane.b32.xlu0 %v1356, 24
        %v1391 = vpop.permute.xlu0 %1390
        %1393 = vst.msk [vmem:[#allocation3 + $0x8] sm:$0xff] %vm1376, %v1391
        %v1394 = vld [vmem:[#allocation3] sm:$0xff]
        %v1395 = vld [vmem:[#allocation3 + $0x8] sm:$0xff]
        %v1396 = vpack.c.bf16 %v1395, %v1394
        %v1397 = vld [vmem:[%s774] sm:$0xf]
        %v1398 = vld [vmem:[%s774 + $0x4] sm:$0xf]
        %v1399 = vld [vmem:[%s774 + $0x8] sm:$0xf]
        %v1400 = vld [vmem:[%s774 + $0xc] sm:$0xf]
        %v1401 = vld [vmem:[%s777] sm:$0x1]
        %v1403 = vperm.slane %v1401, 0
        %v1409 = vunpack.c.l.b16 %v1397
        %v1410 = vunpack.c.l.b16 %v1398
        %v1411 = vunpack.c.l.b16 %v1399
        %v1412 = vunpack.c.l.b16 %v1400
        %v1413 = vpack.c.b16 %v1410, %v1409
        %v1414 = vpack.c.b16 %v1412, %v1411
        %v1418 = vsel %vm833, %v1396, 0
        %1420 = vmatpush.bf16.msra.mxu0 0
        %1421 = vmatpush.bf16.msra.mxu0 0
        %1422 = vmatpush.bf16.msra.mxu0 0
        %1423 = vmatpush.bf16.msra.mxu0 0
        %1424 = vmatpush.bf16.msra.mxu0 0
        %1425 = vmatpush.bf16.msra.mxu0 0
        %1426 = vmatpush.bf16.msra.mxu0 %v1414
        %1427 = vmatpush.bf16.msra.mxu0 %v1413
        %1428 = vmatmul.bf16.gmra.mxu0 %v1418
        %v1429 = vpop.f32.mrf.mxu0
        %v1430 = vadd.f32 %v1403, %v1429
        %v1431 = vpop.f32.mrf.mxu0
        %v1432 = vadd.f32 %v1403, %v1431
        %1433 = vdwg.mxu0
        %v1434 = vadd.f32 %v810, %v1430
        %v1435 = vadd.f32 %v811, %v1432
        %v1436 = vld [vmem:[%s662] sm:$0x1]
        %v1437 = vld [vmem:[%s780] sm:$0x1]
        %v1438 = vsel %vm833, %v1434, 0.0
        %1439 = vadd.xlane.f32.xlu0 %v1438
        %v1440 = vpop.xlane.xlu0 %1439
        %v1441 = vsel %vm833, %v1435, 0.0
        %1442 = vadd.xlane.f32.xlu0 %v1441
        %v1443 = vpop.xlane.xlu0 %1442
        %v1444 = vrcp.pop 32.0
        %v1445 = vmul.f32 32.0, %v1444
        %v1446 = vsub.f32 1.0, %v1445
        %v1447 = vmul.f32 %v1444, %v1446
        %v1448 = vadd.f32 %v1444, %v1447
        %vm1449 = vweird.f32 %v1444
        %v1450 = vsel %vm1449, %v1444, %v1448
        %v1451 = vmul.f32 %v1440, %v1450
        %v1452 = vmul.f32 %v1443, %v1450
        %v1453 = vsub.f32 %v1434, %v1451
        %v1454 = vsub.f32 %v1435, %v1452
        %v1455 = vmul.f32 %v1453, %v1453
        %v1456 = vmul.f32 %v1454, %v1454
        %v1457 = vsel %vm833, %v1455, 0.0
        %1458 = vadd.xlane.f32.xlu0 %v1457
        %v1459 = vpop.xlane.xlu0 %1458
        %v1460 = vsel %vm833, %v1456, 0.0
        %1461 = vadd.xlane.f32.xlu0 %v1460
        %v1462 = vpop.xlane.xlu0 %1461
        %v1463 = vmul.f32 %v1459, %v1450
        %v1464 = vmul.f32 %v1462, %v1450
        %v1465 = vadd.f32 %v1463, 1e-05
        %v1466 = vadd.f32 %v1464, 1e-05
        %v1467 = vrsqrt.pop %v1465
        %v1468 = vmul.f32 %v1467, %v1465
        %v1469 = vmul.f32 %v1468, %v1467
        %v1470 = vmul.f32 0.5, %v1469
        %v1471 = vsub.f32 1.5, %v1470
        %v1472 = vmul.f32 %v1467, %v1471
        %vm1473 = vweird.f32 %v1465
        %vm1474 = vweird.f32 %v1467
        %vm1475 = vmor %vm1473, %vm1474
        %v1476 = vsel %vm1475, %v1467, %v1472
        %v1477 = vrsqrt.pop %v1466
        %v1478 = vmul.f32 %v1477, %v1466
        %v1479 = vmul.f32 %v1478, %v1477
        %v1480 = vmul.f32 0.5, %v1479
        %v1481 = vsub.f32 1.5, %v1480
        %v1482 = vmul.f32 %v1477, %v1481
        %vm1483 = vweird.f32 %v1466
        %vm1484 = vweird.f32 %v1477
        %vm1485 = vmor %vm1483, %vm1484
        %v1486 = vsel %vm1485, %v1477, %v1482
        %v1487 = vmul.f32 %v1453, %v1476
        %v1488 = vmul.f32 %v1454, %v1486
        %v1490 = vperm.slane %v1436, 0
        %v1492 = vmul.f32 %v1487, %v1490
        %v1493 = vmul.f32 %v1488, %v1490
        %v1495 = vperm.slane %v1437, 0
        %v1497 = vadd.f32 %v1492, %v1495
        %v1498 = vadd.f32 %v1493, %v1495
        %v1499 = vpack.c.bf16 %v1498, %v1497
        %v1500 = vld [vmem:[%s785] sm:$0xf]
        %v1501 = vld [vmem:[%s785 + $0x4] sm:$0xf]
        %v1502 = vld [vmem:[%s785 + $0x8] sm:$0xf]
        %v1503 = vld [vmem:[%s785 + $0xc] sm:$0xf]
        %v1504 = vld [vmem:[%s788] sm:$0x1]
        %v1506 = vperm.slane %v1504, 0
        %v1512 = vunpack.c.l.b16 %v1500
        %v1513 = vunpack.c.l.b16 %v1501
        %v1514 = vunpack.c.l.b16 %v1502
        %v1515 = vunpack.c.l.b16 %v1503
        %v1516 = vpack.c.b16 %v1513, %v1512
        %v1517 = vpack.c.b16 %v1515, %v1514
        %v1521 = vsel %vm833, %v1499, 0
        %1523 = vmatpush.bf16.msra.mxu0 0
        %1524 = vmatpush.bf16.msra.mxu0 0
        %1525 = vmatpush.bf16.msra.mxu0 0
        %1526 = vmatpush.bf16.msra.mxu0 0
        %1527 = vmatpush.bf16.msra.mxu0 0
        %1528 = vmatpush.bf16.msra.mxu0 0
        %1529 = vmatpush.bf16.msra.mxu0 %v1517
        %1530 = vmatpush.bf16.msra.mxu0 %v1516
        %1531 = vmatmul.bf16.gmra.mxu0 %v1521
        %v1532 = vpop.f32.mrf.mxu0
        %v1533 = vadd.f32 %v1506, %v1532
        %v1534 = vpop.f32.mrf.mxu0
        %v1535 = vadd.f32 %v1506, %v1534
        %1536 = vdwg.mxu0
        %v1537 = vmax.f32 %v1533, 0.0
        %v1538 = vmax.f32 %v1535, 0.0
        %v1539 = vpack.c.bf16 %v1538, %v1537
        %v1540 = vld [vmem:[%s793] sm:$0xf]
        %v1541 = vld [vmem:[%s793 + $0x4] sm:$0xf]
        %v1542 = vld [vmem:[%s793 + $0x8] sm:$0xf]
        %v1543 = vld [vmem:[%s793 + $0xc] sm:$0xf]
        %v1544 = vld [vmem:[%s793 + $0x10] sm:$0xf]
        %v1545 = vld [vmem:[%s793 + $0x14] sm:$0xf]
        %v1546 = vld [vmem:[%s793 + $0x18] sm:$0xf]
        %v1547 = vld [vmem:[%s793 + $0x1c] sm:$0xf]
        %v1548 = vld [vmem:[%s796] sm:$0x1]
        %v1550 = vperm.slane %v1548, 0
        %v1560 = vunpack.c.l.b16 %v1540
        %v1561 = vunpack.c.l.b16 %v1541
        %v1562 = vunpack.c.l.b16 %v1542
        %v1563 = vunpack.c.l.b16 %v1543
        %v1564 = vunpack.c.l.b16 %v1544
        %v1565 = vunpack.c.l.b16 %v1545
        %v1566 = vunpack.c.l.b16 %v1546
        %v1567 = vunpack.c.l.b16 %v1547
        %v1568 = vpack.c.b16 %v1561, %v1560
        %v1569 = vpack.c.b16 %v1563, %v1562
        %v1570 = vpack.c.b16 %v1565, %v1564
        %v1571 = vpack.c.b16 %v1567, %v1566
        %vm1576 = vcmask 523264
        %v1578 = vsel %vm1576, %v1539, 0
        %1580 = vmatpush.bf16.msra.mxu0 0
        %1581 = vmatpush.bf16.msra.mxu0 0
        %1582 = vmatpush.bf16.msra.mxu0 0
        %1583 = vmatpush.bf16.msra.mxu0 0
        %1584 = vmatpush.bf16.msra.mxu0 %v1571
        %1585 = vmatpush.bf16.msra.mxu0 %v1570
        %1586 = vmatpush.bf16.msra.mxu0 %v1569
        %1587 = vmatpush.bf16.msra.mxu0 %v1568
        %1588 = vmatmul.bf16.gmra.mxu0 %v1578
        %v1589 = vpop.f32.mrf.mxu0
        %v1590 = vadd.f32 %v1550, %v1589
        %v1591 = vpop.f32.mrf.mxu0
        %v1592 = vadd.f32 %v1550, %v1591
        %1593 = vdwg.mxu0
        %v1594 = vadd.f32 %v1497, %v1590
        %v1595 = vadd.f32 %v1498, %v1592
        %v1596 = vld [vmem:[%s671] sm:$0x1]
        %v1597 = vld [vmem:[%s799] sm:$0x1]
        %v1598 = vsel %vm833, %v1594, 0.0
        %1599 = vadd.xlane.f32.xlu0 %v1598
        %v1600 = vpop.xlane.xlu0 %1599
        %v1601 = vsel %vm833, %v1595, 0.0
        %1602 = vadd.xlane.f32.xlu0 %v1601
        %v1603 = vpop.xlane.xlu0 %1602
        %v1604 = vmul.f32 %v1600, %v1450
        %v1605 = vmul.f32 %v1603, %v1450
        %v1606 = vsub.f32 %v1594, %v1604
        %v1607 = vsub.f32 %v1595, %v1605
        %v1608 = vmul.f32 %v1606, %v1606
        %v1609 = vmul.f32 %v1607, %v1607
        %v1610 = vsel %vm833, %v1608, 0.0
        %1611 = vadd.xlane.f32.xlu0 %v1610
        %v1612 = vpop.xlane.xlu0 %1611
        %v1613 = vsel %vm833, %v1609, 0.0
        %1614 = vadd.xlane.f32.xlu0 %v1613
        %v1615 = vpop.xlane.xlu0 %1614
        %v1616 = vmul.f32 %v1612, %v1450
        %v1617 = vmul.f32 %v1615, %v1450
        %v1618 = vadd.f32 %v1616, 1e-05
        %v1619 = vadd.f32 %v1617, 1e-05
        %v1620 = vrsqrt.pop %v1618
        %v1621 = vmul.f32 %v1620, %v1618
        %v1622 = vmul.f32 %v1621, %v1620
        %v1623 = vmul.f32 0.5, %v1622
        %v1624 = vsub.f32 1.5, %v1623
        %v1625 = vmul.f32 %v1620, %v1624
        %vm1626 = vweird.f32 %v1618
        %vm1627 = vweird.f32 %v1620
        %vm1628 = vmor %vm1626, %vm1627
        %v1629 = vsel %vm1628, %v1620, %v1625
        %v1630 = vrsqrt.pop %v1619
        %v1631 = vmul.f32 %v1630, %v1619
        %v1632 = vmul.f32 %v1631, %v1630
        %v1633 = vmul.f32 0.5, %v1632
        %v1634 = vsub.f32 1.5, %v1633
        %v1635 = vmul.f32 %v1630, %v1634
        %vm1636 = vweird.f32 %v1619
        %vm1637 = vweird.f32 %v1630
        %vm1638 = vmor %vm1636, %vm1637
        %v1639 = vsel %vm1638, %v1630, %v1635
        %v1640 = vmul.f32 %v1606, %v1629
        %v1641 = vmul.f32 %v1607, %v1639
        %v1643 = vperm.slane %v1596, 0
        %v1645 = vmul.f32 %v1640, %v1643
        %v1646 = vmul.f32 %v1641, %v1643
        %v1648 = vperm.slane %v1597, 0
        %v1650 = vadd.f32 %v1645, %v1648
        %v1651 = vadd.f32 %v1646, %v1648
        %1652 = vst.msk [vmem:[#allocation2] sm:$0xff] %vm833, %v1650
        %1653 = vst.msk [vmem:[#allocation2 + $0x8] sm:$0xff] %vm833, %v1651
        %p1654 = scmp.eq.s32.totalorder %s36, 1
        // Predicated region
        $region113: #{tpu_custom_call.1} parent=87 // pred_check
          %p1655 = pneg %p1654
        $region114: #{tpu_custom_call.1} parent=87 // pred_check_branch
          %1657 = sbr.rel (%p1655) target = $region116
        $region115: #{tpu_custom_call.1} parent=87 // pred_region
          %v1658 = vld [vmem:[%s13] sm:$0x1]
          %v1659 = vld [vmem:[%s14] sm:$0x1]
          %v1660 = vsel %vm833, %v1650, 0.0
          %1661 = vadd.xlane.f32.xlu0 %v1660
          %v1662 = vpop.xlane.xlu0 %1661
          %v1663 = vsel %vm833, %v1651, 0.0
          %1664 = vadd.xlane.f32.xlu0 %v1663
          %v1665 = vpop.xlane.xlu0 %1664
          %v1666 = vmul.f32 %v1662, %v1450
          %v1667 = vmul.f32 %v1665, %v1450
          %v1668 = vsub.f32 %v1650, %v1666
          %v1669 = vsub.f32 %v1651, %v1667
          %v1670 = vmul.f32 %v1668, %v1668
          %v1671 = vmul.f32 %v1669, %v1669
          %v1672 = vsel %vm833, %v1670, 0.0
          %1673 = vadd.xlane.f32.xlu0 %v1672
          %v1674 = vpop.xlane.xlu0 %1673
          %v1675 = vsel %vm833, %v1671, 0.0
          %1676 = vadd.xlane.f32.xlu0 %v1675
          %v1677 = vpop.xlane.xlu0 %1676
          %v1678 = vmul.f32 %v1674, %v1450
          %v1679 = vmul.f32 %v1677, %v1450
          %v1680 = vadd.f32 %v1678, 1e-05
          %v1681 = vadd.f32 %v1679, 1e-05
          %v1682 = vrsqrt.pop %v1680
          %v1683 = vmul.f32 %v1682, %v1680
          %v1684 = vmul.f32 %v1683, %v1682
          %v1685 = vmul.f32 0.5, %v1684
          %v1686 = vsub.f32 1.5, %v1685
          %v1687 = vmul.f32 %v1682, %v1686
          %vm1688 = vweird.f32 %v1680
          %vm1689 = vweird.f32 %v1682
          %vm1690 = vmor %vm1688, %vm1689
          %v1691 = vsel %vm1690, %v1682, %v1687
          %v1692 = vrsqrt.pop %v1681
          %v1693 = vmul.f32 %v1692, %v1681
          %v1694 = vmul.f32 %v1693, %v1692
          %v1695 = vmul.f32 0.5, %v1694
          %v1696 = vsub.f32 1.5, %v1695
          %v1697 = vmul.f32 %v1692, %v1696
          %vm1698 = vweird.f32 %v1681
          %vm1699 = vweird.f32 %v1692
          %vm1700 = vmor %vm1698, %vm1699
          %v1701 = vsel %vm1700, %v1692, %v1697
          %v1702 = vmul.f32 %v1668, %v1691
          %v1703 = vmul.f32 %v1669, %v1701
          %v1705 = vperm.slane %v1658, 0
          %v1707 = vmul.f32 %v1702, %v1705
          %v1708 = vmul.f32 %v1703, %v1705
          %v1710 = vperm.slane %v1659, 0
          %v1712 = vadd.f32 %v1707, %v1710
          %v1713 = vadd.f32 %v1708, %v1710
          %v1714 = vpack.c.bf16 %v1713, %v1712
          %v1715 = vld [vmem:[#allocation12] sm:$0xf]
          %v1716 = vld [vmem:[#allocation12 + $0x4] sm:$0xf]
          %v1717 = vld [vmem:[#allocation12 + $0x8] sm:$0xf]
          %v1718 = vld [vmem:[#allocation12 + $0xc] sm:$0xf]
          %v1719 = vld [vmem:[%s16] sm:$0x1]
          %v1721 = vperm.slane %v1719, 0
          %v1727 = vunpack.c.l.b16 %v1715
          %v1728 = vunpack.c.l.b16 %v1716
          %v1729 = vunpack.c.l.b16 %v1717
          %v1730 = vunpack.c.l.b16 %v1718
          %v1731 = vpack.c.b16 %v1728, %v1727
          %v1732 = vpack.c.b16 %v1730, %v1729
          %v1736 = vsel %vm833, %v1714, 0
          %1738 = vmatpush.bf16.msra.mxu0 0
          %1739 = vmatpush.bf16.msra.mxu0 0
          %1740 = vmatpush.bf16.msra.mxu0 0
          %1741 = vmatpush.bf16.msra.mxu0 0
          %1742 = vmatpush.bf16.msra.mxu0 0
          %1743 = vmatpush.bf16.msra.mxu0 0
          %1744 = vmatpush.bf16.msra.mxu0 %v1732
          %1745 = vmatpush.bf16.msra.mxu0 %v1731
          %1746 = vmatmul.bf16.gmra.mxu0 %v1736
          %v1747 = vpop.f32.mrf.mxu0
          %v1748 = vadd.f32 %v1721, %v1747
          %v1749 = vpop.f32.mrf.mxu0
          %v1750 = vadd.f32 %v1721, %v1749
          %1751 = vdwg.mxu0
          %1752 = vst [vmem:[#allocation13] sm:$0xff] %v1748
          %1753 = vst [vmem:[#allocation13 + $0x8] sm:$0xff] %v1750
        $region116: #{tpu_custom_call.1} parent=87 // pred_fallthru
          _
        // Predicated region
        $region117: #{tpu_custom_call.1} parent=87 // pred_check
          %p1754 = pneg %p466
        $region118: #{tpu_custom_call.1} parent=87 // pred_check_branch
          %1756 = sbr.rel (%p1754) target = $region120
        $region119: #{tpu_custom_call.1} parent=87 // pred_region
          %1758 = vsyncadd [#allocation6], 0
          %s1759 = sshll.u32 [#allocation13], 4
          %s1760 = int_to_ptr.vmem [resolvable:$true] %s1759
          %s1761 = sshll.u32 %s17, 4
          %s1762 = int_to_ptr.hbm [resolvable:$true] %s1761
          %1767 = dma.vmem_to_hbm [thread:$0]  %s1760, 256, %s1762, [#allocation6], 128, 128, 8
        $region120: #{tpu_custom_call.1} parent=87 // pred_fallthru
          _
        // Predicated region
        $region121: #{tpu_custom_call.1} parent=87 // pred_check
          %p1768 = pneg %p466
        $region122: #{tpu_custom_call.1} parent=87 // pred_check_branch
          %1770 = sbr.rel (%p1768) target = $region124
        $region123: #{tpu_custom_call.1} parent=87 // pred_region
          %1772 = dma.done [#allocation6], 256
        $region124: #{tpu_custom_call.1} parent=87 // pred_fallthru
          _
      $region88: #{tpu_custom_call.1} parent=5 // pred_fallthru
        _
      %p1773 = scmp.le.s32.totalorder 2, %s31
      // Predicated region
      $region125: #{tpu_custom_call.1} parent=5 // pred_check
        %p1774 = pneg %p1773
      $region126: #{tpu_custom_call.1} parent=5 // pred_check_branch
        %1776 = sbr.rel (%p1774) target = $region128
      $region127: #{tpu_custom_call.1} parent=5 // pred_region
        %s1777 = ssub.s32 %s31, 2
      $region128: #{tpu_custom_call.1} parent=5 // pred_fallthru
        _
    $region6: #{tpu_custom_call.1} parent=1 // loop_footer
      %s35 = sadd.s32 1, %s31
    $region7: #{tpu_custom_call.1} parent=1 // loop_footer_branch
      %30 = sbr.rel target = $region3
    $region8: #{tpu_custom_call.1} parent=1 // loop_exit
      _
    %1778 = vsyncpa [#allocation5], 1
    %s1779 = scalar_lea.sflag [#allocation5], 1
    %1780 = vsyncpa %s1779, 1
    %1781 = vsyncpa [#allocation8], 1
    %s1782 = scalar_lea.sflag [#allocation8], 1
    %1783 = vsyncpa %s1782, 1
    %1784 = vsyncpa [#allocation11], 1
    %s1785 = scalar_lea.sflag [#allocation11], 1
    %1786 = vsyncpa %s1785, 1
    %1787 = vsyncpa [#allocation6], 1
    %s1788 = scalar_lea.sflag [#allocation6], 1
    %1789 = vsyncpa %s1788, 1

</llo_original>
